<compile_context>
chip_gen: v7x
topology: tpu7x:2x2x1
jax: 0.10.0
libtpu: 0.0.40
codegen_flags: <defaults>
</compile_context>

<pallas_src>
import functools

import jax
import jax.numpy as jnp
from jax.experimental import pallas as pl
from jax.experimental.pallas import tpu as pltpu

_LANE = 128      # channel axes padded to a multiple of the lane width
_SUBLANE = 8     # row tiles are multiples of the sublane count
_HALO = 8        # halo rows pulled from the next row tile (covers kernel_size-1 <= 8)
_EPS = 1e-5      # nn.BatchNorm1d default eps


def _round_up(v, m):
    return (v + m - 1) // m * m


def _row_tiles(l_out, tl_max):
    tl = min(_round_up(l_out, _SUBLANE), tl_max)
    lt = _round_up(l_out, tl)
    return tl, lt, lt // tl


# ----------------------------------------------------------------------------------------
# Phase 1 (fused): previous layer's BN affine on the staged tile -> conv (K shifted
# matmuls on the MXU) -> optional activation -> this layer's BN partial statistics.
# ----------------------------------------------------------------------------------------
def _conv_act_stats_kernel(ss_ref, x_ref, xh_ref, w_ref, y_ref, stats_ref, xcat_ref,
                           *, k_taps, activation, pad_left, l_valid_in, l_valid_out):
    tl = x_ref.shape[0]
    halo = xh_ref.shape[0]
    row0 = pl.program_id(1) * tl

    scale = ss_ref[0:1, :]
    shift = ss_ref[1:2, :]

    # Stage the row tile + its halo once in f32 VMEM scratch, applying the previous
    # layer's fused BatchNorm scale/shift to data rows while keeping the conv
    # zero-padding / alignment rows exactly zero.
    def stage(vals, start):
        v = vals.astype(jnp.float32)
        r = jax.lax.broadcasted_iota(jnp.int32, (v.shape[0], 1), 0) + start
        valid = jnp.logical_and(r >= pad_left, r < pad_left + l_valid_in)
        return jnp.where(valid, v * scale + shift, 0.0)

    xcat_ref[0:tl, :] = stage(x_ref[...], row0)
    xcat_ref[tl:tl + halo, :] = stage(xh_ref[...], row0 + tl)

    # Conv1d as K shifted matmuls, accumulated in f32 on the MXU (operands in w dtype,
    # i.e. bf16 on the fast path).
    y = None
    for k in range(k_taps):                     # static unroll over taps
        xk = xcat_ref[k:k + tl, :].astype(w_ref.dtype)
        t = jnp.dot(xk, w_ref[k], preferred_element_type=jnp.float32)
        y = t if y is None else y + t

    if activation == "relu":
        y = jnp.maximum(y, 0.0)
    elif activation == "tanh":
        y = jnp.tanh(y)
    # activation is None -> identity
    # TODO(synk): arbitrary torch activation callables are not representable here; only
    # None / "relu" / "tanh" are supported.

    y_ref[...] = y.astype(y_ref.dtype)

    # One-pass partial statistics (sum, sum of squares) from the f32 accumulator.
    if l_valid_out is not None:   # mask alignment-padding rows (only when L was rounded up)
        r = jax.lax.broadcasted_iota(jnp.int32, (tl, 1), 0) + row0
        y = jnp.where(r < l_valid_out, y, 0.0)
    stats_ref[0:1, :] = jnp.sum(y, axis=0, keepdims=True)
    stats_ref[1:2, :] = jnp.sum(y * y, axis=0, keepdims=True)


# ----------------------------------------------------------------------------------------
# Phase 2 (final layer only): apply the fused BatchNorm affine  y * scale + shift.
# ----------------------------------------------------------------------------------------
def _normalize_kernel(ss_ref, y_ref, o_ref):
    y = y_ref[...].astype(jnp.float32)
    o_ref[...] = (y * ss_ref[0:1, :] + ss_ref[1:2, :]).astype(o_ref.dtype)


# ----------------------------------------------------------------------------------------
# One BatchNormConv1d layer (NLC layout, lane-padded channels).
# ----------------------------------------------------------------------------------------
def _bn_conv1d_layer(x_nlc, ss_in, weight, gamma, beta, *, l_in, stride, padding,
                     activation, compute_dtype, eps, tl_max):
    """x_nlc: (N, >=l_in, C_in_pad) compute_dtype, PRE-normalization output of the
    previous layer (rows [0, l_in) valid); ss_in: (2, C_in_pad) f32 fused scale/shift of
    the previous BatchNorm (identity for the stack input); weight: (C_out, C_in, K) f32.
    Returns (y, ss_out, l_out): this layer's pre-normalization conv+act output
    (N, lt, C_out_pad), its fused BN scale/shift, and the valid output length."""
    assert stride == 1, "module default stride=1 only"
    # TODO(synk): strided conv (stride > 1) is not implemented.
    n, _, c_in_pad = x_nlc.shape
    c_out, c_in, k = weight.shape
    assert c_in <= c_in_pad and c_in_pad % _LANE == 0
    assert k - 1 <= _HALO, "kernel_size up to 9 supported by the 8-row halo"
    assert ss_in.shape == (2, c_in_pad)

    l_out = l_in + 2 * padding - k + 1
    c_out_pad = _round_up(c_out, _LANE)
    tl, lt, num_lt = _row_tiles(l_out, tl_max)

    # Padded input: conv zero-pad (left) + conv/alignment/halo zero-pad (right).
    xp = jnp.pad(x_nlc[:, :l_in, :],
                 ((0, 0), (padding, lt + _HALO - l_in - padding), (0, 0)))

    # Weights as (K, C_in_pad, C_out_pad); zero padding keeps the padded channels inert.
    w = jnp.transpose(weight, (2, 1, 0)).astype(compute_dtype)
    w = jnp.pad(w, ((0, 0), (0, c_in_pad - c_in), (0, c_out_pad - c_out)))

    kern = functools.partial(
        _conv_act_stats_kernel, k_taps=k, activation=activation, pad_left=padding,
        l_valid_in=l_in, l_valid_out=None if lt == l_out else l_out)

    itm = jnp.dtype(compute_dtype).itemsize
    cost = pl.CostEstimate(
        flops=2 * n * lt * k * c_in_pad * c_out_pad,
        transcendentals=(n * lt * c_out_pad) if activation == "tanh" else 0,
        bytes_accessed=(xp.size * xp.dtype.itemsize + w.size * w.dtype.itemsize
                        + ss_in.size * 4 + n * lt * c_out_pad * itm
                        + n * num_lt * 2 * c_out_pad * 4))

    y, part = pl.pallas_call(
        kern,
        grid=(n, num_lt),
        in_specs=[
            # previous layer's fused scale/shift, resident across the grid
            pl.BlockSpec((2, c_in_pad), lambda b, i: (0, 0)),
            # main row tile of this sample
            pl.BlockSpec((None, tl, c_in_pad), lambda b, i: (b, i, 0)),
            # 8-row halo = first rows of the next tile (same array, second spec)
            pl.BlockSpec((None, _HALO, c_in_pad),
                         lambda b, i: (b, (i + 1) * (tl // _HALO), 0)),
            # full weights, resident across the grid
            pl.BlockSpec((k, c_in_pad, c_out_pad), lambda b, i: (0, 0, 0)),
        ],
        out_specs=[
            pl.BlockSpec((None, tl, c_out_pad), lambda b, i: (b, i, 0)),
            pl.BlockSpec((None, None, 2, c_out_pad), lambda b, i: (b, i, 0, 0)),
        ],
        out_shape=[
            jax.ShapeDtypeStruct((n, lt, c_out_pad), compute_dtype),        # conv+act (pre-BN)
            jax.ShapeDtypeStruct((n, num_lt, 2, c_out_pad), jnp.float32),   # partial stats
        ],
        scratch_shapes=[pltpu.VMEM((tl + _HALO, c_in_pad), jnp.float32)],
        compiler_params=pltpu.CompilerParams(
            dimension_semantics=("parallel", "parallel"),
            vmem_limit_bytes=32 * 1024 * 1024),
        cost_estimate=cost,
    )(ss_in, xp, xp, w)

    # Tiny XLA epilogue: reduce per-tile partials -> per-channel mean/var, then fold
    # gamma/beta/eps into one fused scale/shift pair (applied by the NEXT conv kernel or
    # by the final normalize pass) -- hoisted out of the per-tile loop.
    cnt = jnp.float32(n * l_out)
    s1 = jnp.sum(part[:, :, 0, :], axis=(0, 1))
    s2 = jnp.sum(part[:, :, 1, :], axis=(0, 1))
    mean = s1 / cnt
    var = jnp.maximum(s2 / cnt - mean * mean, 0.0)   # biased variance (training-mode BN)
    gamma_p = jnp.pad(gamma.astype(jnp.float32), (0, c_out_pad - c_out), constant_values=1.0)
    beta_p = jnp.pad(beta.astype(jnp.float32), (0, c_out_pad - c_out))
    scale = gamma_p * jax.lax.rsqrt(var + eps)
    shift = beta_p - mean * scale
    ss_out = jnp.stack([scale, shift], axis=0)       # (2, C_out_pad), f32

    return y, ss_out, l_out


# ----------------------------------------------------------------------------------------
# The stack.
# ----------------------------------------------------------------------------------------
def batchnorm_conv1d_stack(x_ncl, params, *, activations=None, stride=1, padding=1,
                           compute_dtype=jnp.bfloat16, eps=_EPS, tl_max=512):
    """BatchNormConv1dStack forward. x_ncl: (N, C_in, L); params: [(weight, gamma, beta)]."""
    if activations is None:
        activations = [None] * len(params)
    assert len(activations) == len(params)

    n, c_in, l = x_ncl.shape
    c_in_pad = _round_up(c_in, _LANE)
    # NCL -> NLC once at the stack boundary; lane-pad the channel axis.
    x = jnp.transpose(x_ncl, (0, 2, 1)).astype(compute_dtype)
    x = jnp.pad(x, ((0, 0), (0, 0), (0, c_in_pad - c_in)))

    # Identity "previous BN" for the first layer.
    ss = jnp.stack([jnp.ones((c_in_pad,), jnp.float32),
                    jnp.zeros((c_in_pad,), jnp.float32)], axis=0)

    l_cur = l
    for (w, g, b), ac in zip(params, activations):
        x, ss, l_cur = _bn_conv1d_layer(
            x, ss, w, g, b, l_in=l_cur, stride=stride, padding=padding, activation=ac,
            compute_dtype=compute_dtype, eps=eps, tl_max=tl_max)
        # TODO(synk): nn.Dropout(p) in training mode uses torch RNG (irreproducible here);
        # applied as identity (eval-mode dropout). Running mean/var buffers are not updated.

    # Final layer's BN affine still has to be applied: one lane-dense normalize pass.
    _, lt, c_last_pad = x.shape
    tl, lt_chk, num_lt = _row_tiles(l_cur, tl_max)
    assert lt_chk == lt

    out = pl.pallas_call(
        _normalize_kernel,
        grid=(n, num_lt),
        in_specs=[
            pl.BlockSpec((2, c_last_pad), lambda b, i: (0, 0)),
            pl.BlockSpec((None, tl, c_last_pad), lambda b, i: (b, i, 0)),
        ],
        out_specs=pl.BlockSpec((None, tl, c_last_pad), lambda b, i: (b, i, 0)),
        out_shape=jax.ShapeDtypeStruct((n, lt, c_last_pad), jnp.float32),
        compiler_params=pltpu.CompilerParams(
            dimension_semantics=("parallel", "parallel"),
            vmem_limit_bytes=32 * 1024 * 1024),
        cost_estimate=pl.CostEstimate(
            flops=2 * n * lt * c_last_pad, transcendentals=0,
            bytes_accessed=n * lt * c_last_pad * (jnp.dtype(compute_dtype).itemsize + 4)
                           + 2 * c_last_pad * 4),
    )(ss, x)

    c_out_last = params[-1][0].shape[0]
    # NLC -> NCL once at the stack boundary; drop the row / channel padding.
    return jnp.transpose(out[:, :l_cur, :c_out_last], (0, 2, 1))


# ----------------------------------------------------------------------------------------
# Pure-JAX reference (PyTorch f32 semantics) and self-test.
# ----------------------------------------------------------------------------------------
def _reference(x, params, activations, padding=1, eps=_EPS):
    for (w, g, b), ac in zip(params, activations):
        y = jax.lax.conv_general_dilated(
            x, w, window_strides=(1,), padding=[(padding, padding)],
            dimension_numbers=("NCH", "OIH", "NCH"))
        if ac == "relu":
            y = jnp.maximum(y, 0.0)
        elif ac == "tanh":
            y = jnp.tanh(y)
        mean = y.mean(axis=(0, 2), keepdims=True)
        var = ((y - mean) ** 2).mean(axis=(0, 2), keepdims=True)
        x = (y - mean) / jnp.sqrt(var + eps) * g.reshape(1, -1, 1) + b.reshape(1, -1, 1)
    return x


if __name__ == "__main__":
    # Small shapes consistent with the module: x is (N, C_in, L).
    N, C_IN, L = 2, 8, 16
    OUT_CHANNELS = [32, 32, 32]
    K, PAD = 3, 1
    ACTS = ("relu", "relu", None)

    key = jax.random.PRNGKey(0)
    params = []
    in_sizes = [C_IN] + OUT_CHANNELS[:-1]
    for in_c, out_c in zip(in_sizes, OUT_CHANNELS):
        key, wk = jax.random.split(key)
        bound = 1.0 / (in_c * K) ** 0.5  # PyTorch Conv1d default init range
        w = jax.random.uniform(wk, (out_c, in_c, K), jnp.float32, -bound, bound)
        gamma = jnp.ones((out_c,), jnp.float32)   # BatchNorm1d default weight
        beta = jnp.zeros((out_c,), jnp.float32)   # BatchNorm1d default bias
        params.append((w, gamma, beta))

    key, xk = jax.random.split(key)
    x = jax.random.normal(xk, (N, C_IN, L), jnp.float32)

    ref = _reference(x, params, ACTS, padding=PAD)

    # 1) float32 MXU-operand path: tight check of the kernel structure / BN math.
    fwd_f32 = jax.jit(functools.partial(batchnorm_conv1d_stack, activations=ACTS,
                                        padding=PAD, compute_dtype=jnp.float32))
    out_f32 = jax.block_until_ready(fwd_f32(x, params))
    assert out_f32.shape == (N, OUT_CHANNELS[-1], L), out_f32.shape
    assert jnp.allclose(out_f32, ref, atol=1e-4, rtol=1e-4), float(jnp.abs(out_f32 - ref).max())

    # 2) bfloat16 MXU-operand path (default fast path on v5e/v6e/v7x); tolerance is sized
    #    for bf16 operand rounding across 3 conv+BN layers -- structural correctness is
    #    already verified tightly by the f32 run above.
    fwd_bf16 = jax.jit(functools.partial(batchnorm_conv1d_stack, activations=ACTS,
                                         padding=PAD, compute_dtype=jnp.bfloat16))
    out_bf16 = jax.block_until_ready(fwd_bf16(x, params))
    assert out_bf16.shape == (N, OUT_CHANNELS[-1], L), out_bf16.shape
    assert jnp.allclose(out_bf16, ref, atol=1e-1, rtol=1e-1), float(jnp.abs(out_bf16 - ref).max())

    print("KERNEL_OK")
</pallas_src>

<mosaic_0001>
module attributes {stable_mosaic.version = 11 : i64} {
  func.func @_conv_act_stats_kernel(%arg0: i32, %arg1: i32, %arg2: memref<2x128xf32, #tpu.memory_space<vmem>>, %arg3: memref<1x16x128xf32, #tpu.memory_space<vmem>>, %arg4: memref<1x8x128xf32, #tpu.memory_space<vmem>>, %arg5: memref<3x128x128xf32, #tpu.memory_space<vmem>>, %arg6: memref<1x16x128xf32, #tpu.memory_space<vmem>>, %arg7: memref<1x1x2x128xf32, #tpu.memory_space<vmem>>, %arg8: memref<24x128xf32, #tpu.memory_space<vmem>>) attributes {dimension_semantics = [#tpu.dimension_semantics<parallel>, #tpu.dimension_semantics<parallel>], iteration_bounds = array<i64: 2, 1>, scalar_prefetch = 0 : i64, scratch_operands = 1 : i64, tpu.core_type = #tpu.core_type<tc>, window_params = [{pipeline_mode = #tpu.pipeline_mode<synchronous>, transform_indices = @transform_0, window_bounds = array<i64: 2, 128>}, {transform_indices = @transform_1, window_bounds = array<i64: 1, 16, 128>}, {transform_indices = @transform_2, window_bounds = array<i64: 1, 8, 128>}, {pipeline_mode = #tpu.pipeline_mode<synchronous>, transform_indices = @transform_3, window_bounds = array<i64: 3, 128, 128>}, {transform_indices = @transform_4, window_bounds = array<i64: 1, 16, 128>}, {transform_indices = @transform_5, window_bounds = array<i64: 1, 1, 2, 128>}]} {
    %c16_i32 = arith.constant 16 : i32
    %0 = arith.muli %arg1, %c16_i32 : i32
    %c0 = arith.constant 0 : index
    %c0_0 = arith.constant 0 : index
    %1 = vector.load %arg2[%c0, %c0_0] : memref<2x128xf32, #tpu.memory_space<vmem>>, vector<1x128xf32>
    %c1 = arith.constant 1 : index
    %c0_1 = arith.constant 0 : index
    %2 = vector.load %arg2[%c1, %c0_1] : memref<2x128xf32, #tpu.memory_space<vmem>>, vector<1x128xf32>
    %c0_2 = arith.constant 0 : index
    %c0_3 = arith.constant 0 : index
    %c0_4 = arith.constant 0 : index
    %3 = vector.load %arg3[%c0_2, %c0_3, %c0_4] : memref<1x16x128xf32, #tpu.memory_space<vmem>>, vector<1x16x128xf32>
    %4 = vector.shape_cast %3 : vector<1x16x128xf32> to vector<16x128xf32>
    %5 = tpu.iota {dimensions = array<i32: 0>} : vector<16x1xi32>
    %6 = vector.broadcast %0 : i32 to vector<16x1xi32>
    %7 = arith.addi %5, %6 : vector<16x1xi32>
    %c1_i32 = arith.constant 1 : i32
    %8 = vector.broadcast %c1_i32 : i32 to vector<16x1xi32>
    %9 = arith.cmpi sge, %7, %8 : vector<16x1xi32>
    %c17_i32 = arith.constant 17 : i32
    %10 = vector.broadcast %c17_i32 : i32 to vector<16x1xi32>
    %11 = arith.cmpi slt, %7, %10 : vector<16x1xi32>
    %12 = arith.andi %9, %11 : vector<16x1xi1>
    %13 = vector.broadcast %1 : vector<1x128xf32> to vector<16x128xf32>
    %14 = arith.mulf %4, %13 : vector<16x128xf32>
    %15 = vector.broadcast %2 : vector<1x128xf32> to vector<16x128xf32>
    %16 = arith.addf %14, %15 : vector<16x128xf32>
    %cst = arith.constant 0.000000e+00 : f32
    %17 = vector.shape_cast %12 : vector<16x1xi1> to vector<16x1xi1>
    %18 = vector.broadcast %17 : vector<16x1xi1> to vector<16x128xi1>
    %19 = vector.broadcast %cst : f32 to vector<16x128xf32>
    %20 = arith.select %18, %16, %19 : vector<16x128xi1>, vector<16x128xf32>
    %c0_5 = arith.constant 0 : index
    %c0_6 = arith.constant 0 : index
    %21 = vector.load %arg8[%c0_5, %c0_6] : memref<24x128xf32, #tpu.memory_space<vmem>>, vector<16x128xf32>
    tpu.vector_store %arg8[%c0_5, %c0_6], %20 {strides = array<i32>} : memref<24x128xf32, #tpu.memory_space<vmem>>, vector<16x128xf32>,
    %c0_7 = arith.constant 0 : index
    %c0_8 = arith.constant 0 : index
    %c0_9 = arith.constant 0 : index
    %22 = vector.load %arg4[%c0_7, %c0_8, %c0_9] : memref<1x8x128xf32, #tpu.memory_space<vmem>>, vector<1x8x128xf32>
    %23 = vector.shape_cast %22 : vector<1x8x128xf32> to vector<8x128xf32>
    %c16_i32_10 = arith.constant 16 : i32
    %24 = arith.addi %0, %c16_i32_10 : i32
    %25 = tpu.iota {dimensions = array<i32: 0>} : vector<8x1xi32>
    %26 = vector.broadcast %24 : i32 to vector<8x1xi32>
    %27 = arith.addi %25, %26 : vector<8x1xi32>
    %c1_i32_11 = arith.constant 1 : i32
    %28 = vector.broadcast %c1_i32_11 : i32 to vector<8x1xi32>
    %29 = arith.cmpi sge, %27, %28 : vector<8x1xi32>
    %c17_i32_12 = arith.constant 17 : i32
    %30 = vector.broadcast %c17_i32_12 : i32 to vector<8x1xi32>
    %31 = arith.cmpi slt, %27, %30 : vector<8x1xi32>
    %32 = arith.andi %29, %31 : vector<8x1xi1>
    %33 = vector.broadcast %1 : vector<1x128xf32> to vector<8x128xf32>
    %34 = arith.mulf %23, %33 : vector<8x128xf32>
    %35 = vector.broadcast %2 : vector<1x128xf32> to vector<8x128xf32>
    %36 = arith.addf %34, %35 : vector<8x128xf32>
    %cst_13 = arith.constant 0.000000e+00 : f32
    %37 = vector.shape_cast %32 : vector<8x1xi1> to vector<8x1xi1>
    %38 = vector.broadcast %37 : vector<8x1xi1> to vector<8x128xi1>
    %39 = vector.broadcast %cst_13 : f32 to vector<8x128xf32>
    %40 = arith.select %38, %36, %39 : vector<8x128xi1>, vector<8x128xf32>
    %c16 = arith.constant 16 : index
    %c0_14 = arith.constant 0 : index
    %41 = vector.load %arg8[%c16, %c0_14] : memref<24x128xf32, #tpu.memory_space<vmem>>, vector<8x128xf32>
    tpu.vector_store %arg8[%c16, %c0_14], %40 {strides = array<i32>} : memref<24x128xf32, #tpu.memory_space<vmem>>, vector<8x128xf32>,
    %c0_15 = arith.constant 0 : index
    %c0_16 = arith.constant 0 : index
    %42 = vector.load %arg8[%c0_15, %c0_16] : memref<24x128xf32, #tpu.memory_space<vmem>>, vector<16x128xf32>
    %c0_17 = arith.constant 0 : index
    %c0_18 = arith.constant 0 : index
    %c0_19 = arith.constant 0 : index
    %43 = vector.load %arg5[%c0_17, %c0_18, %c0_19] : memref<3x128x128xf32, #tpu.memory_space<vmem>>, vector<1x128x128xf32>
    %44 = vector.shape_cast %43 : vector<1x128x128xf32> to vector<128x128xf32>
    %cst_20 = arith.constant dense<0.000000e+00> : vector<16x128xf32>
    %45 = tpu.matmul %42, %44, %cst_20 {dimension_numbers = #tpu.dot_dimension_numbers<[1], [0], [0], [1], [0, 0, 1, 1], [], []>} : vector<16x128xf32>, vector<128x128xf32>, vector<16x128xf32> -> vector<16x128xf32>
    %c1_21 = arith.constant 1 : index
    %c0_22 = arith.constant 0 : index
    %46 = vector.load %arg8[%c1_21, %c0_22] : memref<24x128xf32, #tpu.memory_space<vmem>>, vector<16x128xf32>
    %c1_23 = arith.constant 1 : index
    %c0_24 = arith.constant 0 : index
    %c0_25 = arith.constant 0 : index
    %47 = vector.load %arg5[%c1_23, %c0_24, %c0_25] : memref<3x128x128xf32, #tpu.memory_space<vmem>>, vector<1x128x128xf32>
    %48 = vector.shape_cast %47 : vector<1x128x128xf32> to vector<128x128xf32>
    %cst_26 = arith.constant dense<0.000000e+00> : vector<16x128xf32>
    %49 = tpu.matmul %46, %48, %cst_26 {dimension_numbers = #tpu.dot_dimension_numbers<[1], [0], [0], [1], [0, 0, 1, 1], [], []>} : vector<16x128xf32>, vector<128x128xf32>, vector<16x128xf32> -> vector<16x128xf32>
    %50 = arith.addf %45, %49 : vector<16x128xf32>
    %c2 = arith.constant 2 : index
    %c0_27 = arith.constant 0 : index
    %51 = vector.load %arg8[%c2, %c0_27] : memref<24x128xf32, #tpu.memory_space<vmem>>, vector<16x128xf32>
    %c2_28 = arith.constant 2 : index
    %c0_29 = arith.constant 0 : index
    %c0_30 = arith.constant 0 : index
    %52 = vector.load %arg5[%c2_28, %c0_29, %c0_30] : memref<3x128x128xf32, #tpu.memory_space<vmem>>, vector<1x128x128xf32>
    %53 = vector.shape_cast %52 : vector<1x128x128xf32> to vector<128x128xf32>
    %cst_31 = arith.constant dense<0.000000e+00> : vector<16x128xf32>
    %54 = tpu.matmul %51, %53, %cst_31 {dimension_numbers = #tpu.dot_dimension_numbers<[1], [0], [0], [1], [0, 0, 1, 1], [], []>} : vector<16x128xf32>, vector<128x128xf32>, vector<16x128xf32> -> vector<16x128xf32>
    %55 = arith.addf %50, %54 : vector<16x128xf32>
    %cst_32 = arith.constant 0.000000e+00 : f32
    %56 = vector.broadcast %cst_32 : f32 to vector<16x128xf32>
    %57 = arith.maximumf %55, %56 : vector<16x128xf32>
    %c0_33 = arith.constant 0 : index
    %c0_34 = arith.constant 0 : index
    %c0_35 = arith.constant 0 : index
    %58 = vector.load %arg6[%c0_33, %c0_34, %c0_35] : memref<1x16x128xf32, #tpu.memory_space<vmem>>, vector<1x16x128xf32>
    %59 = vector.shape_cast %58 : vector<1x16x128xf32> to vector<16x128xf32>
    %60 = vector.shape_cast %57 : vector<16x128xf32> to vector<1x16x128xf32>
    tpu.vector_store %arg6[%c0_33, %c0_34, %c0_35], %60 {strides = array<i32>} : memref<1x16x128xf32, #tpu.memory_space<vmem>>, vector<1x16x128xf32>,
    %cst_36 = arith.constant dense<0.000000e+00> : vector<128xf32>
    %61 = vector.multi_reduction <add>, %57, %cst_36 [0] : vector<16x128xf32> to vector<128xf32>
    %62 = vector.shape_cast %61 : vector<128xf32> to vector<1x128xf32>
    %c0_37 = arith.constant 0 : index
    %c0_38 = arith.constant 0 : index
    %c0_39 = arith.constant 0 : index
    %c0_40 = arith.constant 0 : index
    %63 = vector.load %arg7[%c0_37, %c0_38, %c0_39, %c0_40] : memref<1x1x2x128xf32, #tpu.memory_space<vmem>>, vector<1x1x1x128xf32>
    %64 = vector.shape_cast %63 : vector<1x1x1x128xf32> to vector<1x128xf32>
    %65 = vector.shape_cast %62 : vector<1x128xf32> to vector<1x1x1x128xf32>
    tpu.vector_store %arg7[%c0_37, %c0_38, %c0_39, %c0_40], %65 {strides = array<i32>} : memref<1x1x2x128xf32, #tpu.memory_space<vmem>>, vector<1x1x1x128xf32>,
    %66 = arith.mulf %57, %57 : vector<16x128xf32>
    %cst_41 = arith.constant dense<0.000000e+00> : vector<128xf32>
    %67 = vector.multi_reduction <add>, %66, %cst_41 [0] : vector<16x128xf32> to vector<128xf32>
    %68 = vector.shape_cast %67 : vector<128xf32> to vector<1x128xf32>
    %c0_42 = arith.constant 0 : index
    %c0_43 = arith.constant 0 : index
    %c1_44 = arith.constant 1 : index
    %c0_45 = arith.constant 0 : index
    %69 = vector.load %arg7[%c0_42, %c0_43, %c1_44, %c0_45] : memref<1x1x2x128xf32, #tpu.memory_space<vmem>>, vector<1x1x1x128xf32>
    %70 = vector.shape_cast %69 : vector<1x1x1x128xf32> to vector<1x128xf32>
    %71 = vector.shape_cast %68 : vector<1x128xf32> to vector<1x1x1x128xf32>
    tpu.vector_store %arg7[%c0_42, %c0_43, %c1_44, %c0_45], %71 {strides = array<i32>} : memref<1x1x2x128xf32, #tpu.memory_space<vmem>>, vector<1x1x1x128xf32>,
    return
  }
  func.func @transform_0(%arg0: i32, %arg1: i32) -> (i32, i32) {
    %c0_i32 = arith.constant 0 : i32
    %c0_i32_0 = arith.constant 0 : i32
    %c0_i32_1 = arith.constant 0 : i32
    return %c0_i32, %c0_i32_0 : i32, i32
  }
  func.func @transform_1(%arg0: i32, %arg1: i32) -> (i32, i32, i32) {
    %c0_i32 = arith.constant 0 : i32
    %c0_i32_0 = arith.constant 0 : i32
    return %arg0, %arg1, %c0_i32 : i32, i32, i32
  }
  func.func @transform_2(%arg0: i32, %arg1: i32) -> (i32, i32, i32) {
    %c1_i32 = arith.constant 1 : i32
    %0 = arith.addi %arg1, %c1_i32 : i32
    %c2_i32 = arith.constant 2 : i32
    %1 = arith.muli %0, %c2_i32 : i32
    %c0_i32 = arith.constant 0 : i32
    %c0_i32_0 = arith.constant 0 : i32
    return %arg0, %1, %c0_i32 : i32, i32, i32
  }
  func.func @transform_3(%arg0: i32, %arg1: i32) -> (i32, i32, i32) {
    %c0_i32 = arith.constant 0 : i32
    %c0_i32_0 = arith.constant 0 : i32
    %c0_i32_1 = arith.constant 0 : i32
    %c0_i32_2 = arith.constant 0 : i32
    return %c0_i32, %c0_i32_0, %c0_i32_1 : i32, i32, i32
  }
  func.func @transform_4(%arg0: i32, %arg1: i32) -> (i32, i32, i32) {
    %c0_i32 = arith.constant 0 : i32
    %c0_i32_0 = arith.constant 0 : i32
    return %arg0, %arg1, %c0_i32 : i32, i32, i32
  }
  func.func @transform_5(%arg0: i32, %arg1: i32) -> (i32, i32, i32, i32) {
    %c0_i32 = arith.constant 0 : i32
    %c0_i32_0 = arith.constant 0 : i32
    %c0_i32_1 = arith.constant 0 : i32
    return %arg0, %arg1, %c0_i32, %c0_i32_0 : i32, i32, i32, i32
  }
}

module attributes {stable_mosaic.version = 11 : i64} {
  func.func @_normalize_kernel(%arg0: i32, %arg1: i32, %arg2: memref<2x128xf32, #tpu.memory_space<vmem>>, %arg3: memref<1x16x128xf32, #tpu.memory_space<vmem>>, %arg4: memref<1x16x128xf32, #tpu.memory_space<vmem>>) attributes {dimension_semantics = [#tpu.dimension_semantics<parallel>, #tpu.dimension_semantics<parallel>], iteration_bounds = array<i64: 2, 1>, scalar_prefetch = 0 : i64, scratch_operands = 0 : i64, tpu.core_type = #tpu.core_type<tc>, window_params = [{pipeline_mode = #tpu.pipeline_mode<synchronous>, transform_indices = @transform_0, window_bounds = array<i64: 2, 128>}, {transform_indices = @transform_1, window_bounds = array<i64: 1, 16, 128>}, {transform_indices = @transform_2, window_bounds = array<i64: 1, 16, 128>}]} {
    %c0 = arith.constant 0 : index
    %c0_0 = arith.constant 0 : index
    %c0_1 = arith.constant 0 : index
    %0 = vector.load %arg3[%c0, %c0_0, %c0_1] : memref<1x16x128xf32, #tpu.memory_space<vmem>>, vector<1x16x128xf32>
    %1 = vector.shape_cast %0 : vector<1x16x128xf32> to vector<16x128xf32>
    %c0_2 = arith.constant 0 : index
    %c0_3 = arith.constant 0 : index
    %2 = vector.load %arg2[%c0_2, %c0_3] : memref<2x128xf32, #tpu.memory_space<vmem>>, vector<1x128xf32>
    %3 = vector.broadcast %2 : vector<1x128xf32> to vector<16x128xf32>
    %4 = arith.mulf %1, %3 : vector<16x128xf32>
    %c1 = arith.constant 1 : index
    %c0_4 = arith.constant 0 : index
    %5 = vector.load %arg2[%c1, %c0_4] : memref<2x128xf32, #tpu.memory_space<vmem>>, vector<1x128xf32>
    %6 = vector.broadcast %5 : vector<1x128xf32> to vector<16x128xf32>
    %7 = arith.addf %4, %6 : vector<16x128xf32>
    %c0_5 = arith.constant 0 : index
    %c0_6 = arith.constant 0 : index
    %c0_7 = arith.constant 0 : index
    %8 = vector.load %arg4[%c0_5, %c0_6, %c0_7] : memref<1x16x128xf32, #tpu.memory_space<vmem>>, vector<1x16x128xf32>
    %9 = vector.shape_cast %8 : vector<1x16x128xf32> to vector<16x128xf32>
    %10 = vector.shape_cast %7 : vector<16x128xf32> to vector<1x16x128xf32>
    tpu.vector_store %arg4[%c0_5, %c0_6, %c0_7], %10 {strides = array<i32>} : memref<1x16x128xf32, #tpu.memory_space<vmem>>, vector<1x16x128xf32>,
    return
  }
  func.func @transform_0(%arg0: i32, %arg1: i32) -> (i32, i32) {
    %c0_i32 = arith.constant 0 : i32
    %c0_i32_0 = arith.constant 0 : i32
    %c0_i32_1 = arith.constant 0 : i32
    return %c0_i32, %c0_i32_0 : i32, i32
  }
  func.func @transform_1(%arg0: i32, %arg1: i32) -> (i32, i32, i32) {
    %c0_i32 = arith.constant 0 : i32
    %c0_i32_0 = arith.constant 0 : i32
    return %arg0, %arg1, %c0_i32 : i32, i32, i32
  }
  func.func @transform_2(%arg0: i32, %arg1: i32) -> (i32, i32, i32) {
    %c0_i32 = arith.constant 0 : i32
    %c0_i32_0 = arith.constant 0 : i32
    return %arg0, %arg1, %c0_i32 : i32, i32, i32
  }
}

module attributes {stable_mosaic.version = 11 : i64} {
  func.func @_conv_act_stats_kernel(%arg0: i32, %arg1: i32, %arg2: memref<2x128xf32, #tpu.memory_space<vmem>>, %arg3: memref<1x16x128xf32, #tpu.memory_space<vmem>>, %arg4: memref<1x8x128xf32, #tpu.memory_space<vmem>>, %arg5: memref<3x128x128xf32, #tpu.memory_space<vmem>>, %arg6: memref<1x16x128xf32, #tpu.memory_space<vmem>>, %arg7: memref<1x1x2x128xf32, #tpu.memory_space<vmem>>, %arg8: memref<24x128xf32, #tpu.memory_space<vmem>>) attributes {dimension_semantics = [#tpu.dimension_semantics<parallel>, #tpu.dimension_semantics<parallel>], iteration_bounds = array<i64: 2, 1>, scalar_prefetch = 0 : i64, scratch_operands = 1 : i64, tpu.core_type = #tpu.core_type<tc>, window_params = [{pipeline_mode = #tpu.pipeline_mode<synchronous>, transform_indices = @transform_0, window_bounds = array<i64: 2, 128>}, {transform_indices = @transform_1, window_bounds = array<i64: 1, 16, 128>}, {transform_indices = @transform_2, window_bounds = array<i64: 1, 8, 128>}, {pipeline_mode = #tpu.pipeline_mode<synchronous>, transform_indices = @transform_3, window_bounds = array<i64: 3, 128, 128>}, {transform_indices = @transform_4, window_bounds = array<i64: 1, 16, 128>}, {transform_indices = @transform_5, window_bounds = array<i64: 1, 1, 2, 128>}]} {
    %c16_i32 = arith.constant 16 : i32
    %0 = arith.muli %arg1, %c16_i32 : i32
    %c0 = arith.constant 0 : index
    %c0_0 = arith.constant 0 : index
    %1 = vector.load %arg2[%c0, %c0_0] : memref<2x128xf32, #tpu.memory_space<vmem>>, vector<1x128xf32>
    %c1 = arith.constant 1 : index
    %c0_1 = arith.constant 0 : index
    %2 = vector.load %arg2[%c1, %c0_1] : memref<2x128xf32, #tpu.memory_space<vmem>>, vector<1x128xf32>
    %c0_2 = arith.constant 0 : index
    %c0_3 = arith.constant 0 : index
    %c0_4 = arith.constant 0 : index
    %3 = vector.load %arg3[%c0_2, %c0_3, %c0_4] : memref<1x16x128xf32, #tpu.memory_space<vmem>>, vector<1x16x128xf32>
    %4 = vector.shape_cast %3 : vector<1x16x128xf32> to vector<16x128xf32>
    %5 = tpu.iota {dimensions = array<i32: 0>} : vector<16x1xi32>
    %6 = vector.broadcast %0 : i32 to vector<16x1xi32>
    %7 = arith.addi %5, %6 : vector<16x1xi32>
    %c1_i32 = arith.constant 1 : i32
    %8 = vector.broadcast %c1_i32 : i32 to vector<16x1xi32>
    %9 = arith.cmpi sge, %7, %8 : vector<16x1xi32>
    %c17_i32 = arith.constant 17 : i32
    %10 = vector.broadcast %c17_i32 : i32 to vector<16x1xi32>
    %11 = arith.cmpi slt, %7, %10 : vector<16x1xi32>
    %12 = arith.andi %9, %11 : vector<16x1xi1>
    %13 = vector.broadcast %1 : vector<1x128xf32> to vector<16x128xf32>
    %14 = arith.mulf %4, %13 : vector<16x128xf32>
    %15 = vector.broadcast %2 : vector<1x128xf32> to vector<16x128xf32>
    %16 = arith.addf %14, %15 : vector<16x128xf32>
    %cst = arith.constant 0.000000e+00 : f32
    %17 = vector.shape_cast %12 : vector<16x1xi1> to vector<16x1xi1>
    %18 = vector.broadcast %17 : vector<16x1xi1> to vector<16x128xi1>
    %19 = vector.broadcast %cst : f32 to vector<16x128xf32>
    %20 = arith.select %18, %16, %19 : vector<16x128xi1>, vector<16x128xf32>
    %c0_5 = arith.constant 0 : index
    %c0_6 = arith.constant 0 : index
    %21 = vector.load %arg8[%c0_5, %c0_6] : memref<24x128xf32, #tpu.memory_space<vmem>>, vector<16x128xf32>
    tpu.vector_store %arg8[%c0_5, %c0_6], %20 {strides = array<i32>} : memref<24x128xf32, #tpu.memory_space<vmem>>, vector<16x128xf32>,
    %c0_7 = arith.constant 0 : index
    %c0_8 = arith.constant 0 : index
    %c0_9 = arith.constant 0 : index
    %22 = vector.load %arg4[%c0_7, %c0_8, %c0_9] : memref<1x8x128xf32, #tpu.memory_space<vmem>>, vector<1x8x128xf32>
    %23 = vector.shape_cast %22 : vector<1x8x128xf32> to vector<8x128xf32>
    %c16_i32_10 = arith.constant 16 : i32
    %24 = arith.addi %0, %c16_i32_10 : i32
    %25 = tpu.iota {dimensions = array<i32: 0>} : vector<8x1xi32>
    %26 = vector.broadcast %24 : i32 to vector<8x1xi32>
    %27 = arith.addi %25, %26 : vector<8x1xi32>
    %c1_i32_11 = arith.constant 1 : i32
    %28 = vector.broadcast %c1_i32_11 : i32 to vector<8x1xi32>
    %29 = arith.cmpi sge, %27, %28 : vector<8x1xi32>
    %c17_i32_12 = arith.constant 17 : i32
    %30 = vector.broadcast %c17_i32_12 : i32 to vector<8x1xi32>
    %31 = arith.cmpi slt, %27, %30 : vector<8x1xi32>
    %32 = arith.andi %29, %31 : vector<8x1xi1>
    %33 = vector.broadcast %1 : vector<1x128xf32> to vector<8x128xf32>
    %34 = arith.mulf %23, %33 : vector<8x128xf32>
    %35 = vector.broadcast %2 : vector<1x128xf32> to vector<8x128xf32>
    %36 = arith.addf %34, %35 : vector<8x128xf32>
    %cst_13 = arith.constant 0.000000e+00 : f32
    %37 = vector.shape_cast %32 : vector<8x1xi1> to vector<8x1xi1>
    %38 = vector.broadcast %37 : vector<8x1xi1> to vector<8x128xi1>
    %39 = vector.broadcast %cst_13 : f32 to vector<8x128xf32>
    %40 = arith.select %38, %36, %39 : vector<8x128xi1>, vector<8x128xf32>
    %c16 = arith.constant 16 : index
    %c0_14 = arith.constant 0 : index
    %41 = vector.load %arg8[%c16, %c0_14] : memref<24x128xf32, #tpu.memory_space<vmem>>, vector<8x128xf32>
    tpu.vector_store %arg8[%c16, %c0_14], %40 {strides = array<i32>} : memref<24x128xf32, #tpu.memory_space<vmem>>, vector<8x128xf32>,
    %c0_15 = arith.constant 0 : index
    %c0_16 = arith.constant 0 : index
    %42 = vector.load %arg8[%c0_15, %c0_16] : memref<24x128xf32, #tpu.memory_space<vmem>>, vector<16x128xf32>
    %c0_17 = arith.constant 0 : index
    %c0_18 = arith.constant 0 : index
    %c0_19 = arith.constant 0 : index
    %43 = vector.load %arg5[%c0_17, %c0_18, %c0_19] : memref<3x128x128xf32, #tpu.memory_space<vmem>>, vector<1x128x128xf32>
    %44 = vector.shape_cast %43 : vector<1x128x128xf32> to vector<128x128xf32>
    %cst_20 = arith.constant dense<0.000000e+00> : vector<16x128xf32>
    %45 = tpu.matmul %42, %44, %cst_20 {dimension_numbers = #tpu.dot_dimension_numbers<[1], [0], [0], [1], [0, 0, 1, 1], [], []>} : vector<16x128xf32>, vector<128x128xf32>, vector<16x128xf32> -> vector<16x128xf32>
    %c1_21 = arith.constant 1 : index
    %c0_22 = arith.constant 0 : index
    %46 = vector.load %arg8[%c1_21, %c0_22] : memref<24x128xf32, #tpu.memory_space<vmem>>, vector<16x128xf32>
    %c1_23 = arith.constant 1 : index
    %c0_24 = arith.constant 0 : index
    %c0_25 = arith.constant 0 : index
    %47 = vector.load %arg5[%c1_23, %c0_24, %c0_25] : memref<3x128x128xf32, #tpu.memory_space<vmem>>, vector<1x128x128xf32>
    %48 = vector.shape_cast %47 : vector<1x128x128xf32> to vector<128x128xf32>
    %cst_26 = arith.constant dense<0.000000e+00> : vector<16x128xf32>
    %49 = tpu.matmul %46, %48, %cst_26 {dimension_numbers = #tpu.dot_dimension_numbers<[1], [0], [0], [1], [0, 0, 1, 1], [], []>} : vector<16x128xf32>, vector<128x128xf32>, vector<16x128xf32> -> vector<16x128xf32>
    %50 = arith.addf %45, %49 : vector<16x128xf32>
    %c2 = arith.constant 2 : index
    %c0_27 = arith.constant 0 : index
    %51 = vector.load %arg8[%c2, %c0_27] : memref<24x128xf32, #tpu.memory_space<vmem>>, vector<16x128xf32>
    %c2_28 = arith.constant 2 : index
    %c0_29 = arith.constant 0 : index
    %c0_30 = arith.constant 0 : index
    %52 = vector.load %arg5[%c2_28, %c0_29, %c0_30] : memref<3x128x128xf32, #tpu.memory_space<vmem>>, vector<1x128x128xf32>
    %53 = vector.shape_cast %52 : vector<1x128x128xf32> to vector<128x128xf32>
    %cst_31 = arith.constant dense<0.000000e+00> : vector<16x128xf32>
    %54 = tpu.matmul %51, %53, %cst_31 {dimension_numbers = #tpu.dot_dimension_numbers<[1], [0], [0], [1], [0, 0, 1, 1], [], []>} : vector<16x128xf32>, vector<128x128xf32>, vector<16x128xf32> -> vector<16x128xf32>
    %55 = arith.addf %50, %54 : vector<16x128xf32>
    %c0_32 = arith.constant 0 : index
    %c0_33 = arith.constant 0 : index
    %c0_34 = arith.constant 0 : index
    %56 = vector.load %arg6[%c0_32, %c0_33, %c0_34] : memref<1x16x128xf32, #tpu.memory_space<vmem>>, vector<1x16x128xf32>
    %57 = vector.shape_cast %56 : vector<1x16x128xf32> to vector<16x128xf32>
    %58 = vector.shape_cast %55 : vector<16x128xf32> to vector<1x16x128xf32>
    tpu.vector_store %arg6[%c0_32, %c0_33, %c0_34], %58 {strides = array<i32>} : memref<1x16x128xf32, #tpu.memory_space<vmem>>, vector<1x16x128xf32>,
    %cst_35 = arith.constant dense<0.000000e+00> : vector<128xf32>
    %59 = vector.multi_reduction <add>, %55, %cst_35 [0] : vector<16x128xf32> to vector<128xf32>
    %60 = vector.shape_cast %59 : vector<128xf32> to vector<1x128xf32>
    %c0_36 = arith.constant 0 : index
    %c0_37 = arith.constant 0 : index
    %c0_38 = arith.constant 0 : index
    %c0_39 = arith.constant 0 : index
    %61 = vector.load %arg7[%c0_36, %c0_37, %c0_38, %c0_39] : memref<1x1x2x128xf32, #tpu.memory_space<vmem>>, vector<1x1x1x128xf32>
    %62 = vector.shape_cast %61 : vector<1x1x1x128xf32> to vector<1x128xf32>
    %63 = vector.shape_cast %60 : vector<1x128xf32> to vector<1x1x1x128xf32>
    tpu.vector_store %arg7[%c0_36, %c0_37, %c0_38, %c0_39], %63 {strides = array<i32>} : memref<1x1x2x128xf32, #tpu.memory_space<vmem>>, vector<1x1x1x128xf32>,
    %64 = arith.mulf %55, %55 : vector<16x128xf32>
    %cst_40 = arith.constant dense<0.000000e+00> : vector<128xf32>
    %65 = vector.multi_reduction <add>, %64, %cst_40 [0] : vector<16x128xf32> to vector<128xf32>
    %66 = vector.shape_cast %65 : vector<128xf32> to vector<1x128xf32>
    %c0_41 = arith.constant 0 : index
    %c0_42 = arith.constant 0 : index
    %c1_43 = arith.constant 1 : index
    %c0_44 = arith.constant 0 : index
    %67 = vector.load %arg7[%c0_41, %c0_42, %c1_43, %c0_44] : memref<1x1x2x128xf32, #tpu.memory_space<vmem>>, vector<1x1x1x128xf32>
    %68 = vector.shape_cast %67 : vector<1x1x1x128xf32> to vector<1x128xf32>
    %69 = vector.shape_cast %66 : vector<1x128xf32> to vector<1x1x1x128xf32>
    tpu.vector_store %arg7[%c0_41, %c0_42, %c1_43, %c0_44], %69 {strides = array<i32>} : memref<1x1x2x128xf32, #tpu.memory_space<vmem>>, vector<1x1x1x128xf32>,
    return
  }
  func.func @transform_0(%arg0: i32, %arg1: i32) -> (i32, i32) {
    %c0_i32 = arith.constant 0 : i32
    %c0_i32_0 = arith.constant 0 : i32
    %c0_i32_1 = arith.constant 0 : i32
    return %c0_i32, %c0_i32_0 : i32, i32
  }
  func.func @transform_1(%arg0: i32, %arg1: i32) -> (i32, i32, i32) {
    %c0_i32 = arith.constant 0 : i32
    %c0_i32_0 = arith.constant 0 : i32
    return %arg0, %arg1, %c0_i32 : i32, i32, i32
  }
  func.func @transform_2(%arg0: i32, %arg1: i32) -> (i32, i32, i32) {
    %c1_i32 = arith.constant 1 : i32
    %0 = arith.addi %arg1, %c1_i32 : i32
    %c2_i32 = arith.constant 2 : i32
    %1 = arith.muli %0, %c2_i32 : i32
    %c0_i32 = arith.constant 0 : i32
    %c0_i32_0 = arith.constant 0 : i32
    return %arg0, %1, %c0_i32 : i32, i32, i32
  }
  func.func @transform_3(%arg0: i32, %arg1: i32) -> (i32, i32, i32) {
    %c0_i32 = arith.constant 0 : i32
    %c0_i32_0 = arith.constant 0 : i32
    %c0_i32_1 = arith.constant 0 : i32
    %c0_i32_2 = arith.constant 0 : i32
    return %c0_i32, %c0_i32_0, %c0_i32_1 : i32, i32, i32
  }
  func.func @transform_4(%arg0: i32, %arg1: i32) -> (i32, i32, i32) {
    %c0_i32 = arith.constant 0 : i32
    %c0_i32_0 = arith.constant 0 : i32
    return %arg0, %arg1, %c0_i32 : i32, i32, i32
  }
  func.func @transform_5(%arg0: i32, %arg1: i32) -> (i32, i32, i32, i32) {
    %c0_i32 = arith.constant 0 : i32
    %c0_i32_0 = arith.constant 0 : i32
    %c0_i32_1 = arith.constant 0 : i32
    return %arg0, %arg1, %c0_i32, %c0_i32_0 : i32, i32, i32, i32
  }
}

</mosaic_0001>

<llo_original>
// kernel: batchnorm_conv1d_stack.7
$region0: #{batchnorm_conv1d_stack.7}
  #allocation0 [shape = 'u32[]', space=smem, size = 0x4, offset = 0x4, fixed_abs, tag = 'smem constant byte address 0x4 - core index']
  #allocation1 [shape = 'u32[144,128]{1,0:T(1,128)}', space=vmem, size = 0x12000, scoped, tag = 'internal scratch']
  %s0 = inlined_call_operand.vmem [shape: f32[2,128], index: 0, kind: input, shape index: {}]
  %s1 = inlined_call_operand.vmem [shape: f32[2,16,128], index: 1, kind: input, shape index: {}]
  %s2 = inlined_call_operand.vmem [shape: f32[2,16,128], index: 2, kind: output, shape index: {}]
  %s3 = sld [smem:[#allocation0]]
  $region41: #{batchnorm_conv1d_stack.7} parent=0
    _
  %s5 = ssub.s32 1, %s3
  %s6 = scalar_select 0, %s5, %s3
  loop: start=0, step=1, limit=4
  $region2: #{batchnorm_conv1d_stack.7} parent=0 // loop_pre_header
    _
  $region3: #{batchnorm_conv1d_stack.7} parent=0 // loop_header
    %s8 = sphi 0, %s12
    %p9 = scmp.ge.s32.totalorder %s8, 4
    %s15 = sphi 0, %s27
    %s16 = sphi 0, %s23
    %s17 = sphi 0, %s15
    %s18 = sphi 0, %s16
    %s19 = sphi 0, %s17
    %s20 = sphi 0, %s18
    %s28 = sphi 0, %s28
    %s30 = sphi 0, %s28
    %s31 = sphi 0, %s30
    %s45 = sphi 0, %s31
    %s53 = sphi 0, %s55
    %s56 = sphi 0, %s53
    %s57 = sphi 0, %s56
    %s73 = sphi 0, %s57
    %s81 = sphi 0, %s83
    %s84 = sphi 0, %s81
    %s85 = sphi 0, %s84
    %s101 = sphi 0, %s85
  $region4: #{batchnorm_conv1d_stack.7} parent=0 // loop_header_branch
    %11 = sbr.rel (%p9) target = $region8
  $region5: #{batchnorm_conv1d_stack.7} parent=0 // loop_body
    %s13 = ssub.s32 %s8, 1
    %s14 = ssub.s32 %s8, 2
    %s21 = sadd.s32 1, %s16
    %p22 = scmp.ge.s32.totalorder %s21, 1
    %s23 = scalar_select %p22, 0, %s21
    %s24 = sadd.s32 1, %s15
    %s25 = scalar_select %p22, %s24, %s15
    %p26 = scmp.ge.s32.totalorder %s25, 2
    %s27 = scalar_select %p26, 0, %s25
    %s29 = sadd.s32 %s28, 1
    %p32 = scmp.eq.s32.totalorder %s8, 1
    %p33 = scmp.ne.s32.totalorder %s28, %s30
    %p34 = scmp.eq.s32.totalorder %s8, 0
    %p35 = por %p33, %p34
    %p36 = scmp.ne.s32.totalorder %s28, %s30
    %p37 = scmp.eq.s32.totalorder %s13, 1
    %p38 = por %p36, %p37
    %p39 = scmp.ne.s32.totalorder %s30, %s31
    %p40 = scmp.eq.s32.totalorder %s13, 0
    %p41 = por %p39, %p40
    %p42 = scmp.ne.s32.totalorder %s30, %s31
    %p43 = scmp.eq.s32.totalorder %s14, 1
    %p44 = por %p42, %p43
    %p46 = scmp.ne.s32.totalorder %s31, %s45
    %p47 = scmp.eq.s32.totalorder %s14, 0
    %p48 = por %p46, %p47
    %s49 = ssub.s32 %s15, %s27
    %s50 = ssub.s32 %s16, %s23
    %s51 = sor.u32 %s49, %s50
    %p52 = scmp.eq.s32.totalorder %s51, 0
    %s54 = sadd.s32 %s53, 1
    %s55 = scalar_select %p52, %s53, %s54
    %p58 = pneg %p52
    %p59 = scmp.eq.s32.totalorder %s8, 1
    %p60 = por %p58, %p59
    %p61 = scmp.ne.s32.totalorder %s53, %s56
    %p62 = scmp.eq.s32.totalorder %s8, 0
    %p63 = por %p61, %p62
    %p64 = scmp.ne.s32.totalorder %s53, %s56
    %p65 = scmp.eq.s32.totalorder %s13, 1
    %p66 = por %p64, %p65
    %p67 = scmp.ne.s32.totalorder %s56, %s57
    %p68 = scmp.eq.s32.totalorder %s13, 0
    %p69 = por %p67, %p68
    %p70 = scmp.ne.s32.totalorder %s56, %s57
    %p71 = scmp.eq.s32.totalorder %s14, 1
    %p72 = por %p70, %p71
    %p74 = scmp.ne.s32.totalorder %s57, %s73
    %p75 = scmp.eq.s32.totalorder %s14, 0
    %p76 = por %p74, %p75
    %s77 = ssub.s32 %s15, %s27
    %s78 = ssub.s32 %s16, %s23
    %s79 = sor.u32 %s77, %s78
    %p80 = scmp.eq.s32.totalorder %s79, 0
    %s82 = sadd.s32 %s81, 1
    %s83 = scalar_select %p80, %s81, %s82
    %p86 = pneg %p80
    %p87 = scmp.eq.s32.totalorder %s8, 1
    %p88 = por %p86, %p87
    %p89 = scmp.ne.s32.totalorder %s81, %s84
    %p90 = scmp.eq.s32.totalorder %s8, 0
    %p91 = por %p89, %p90
    %p92 = scmp.ne.s32.totalorder %s81, %s84
    %p93 = scmp.eq.s32.totalorder %s13, 1
    %p94 = por %p92, %p93
    %p95 = scmp.ne.s32.totalorder %s84, %s85
    %p96 = scmp.eq.s32.totalorder %s13, 0
    %p97 = por %p95, %p96
    %p98 = scmp.ne.s32.totalorder %s84, %s85
    %p99 = scmp.eq.s32.totalorder %s14, 1
    %p100 = por %p98, %p99
    %p102 = scmp.ne.s32.totalorder %s85, %s101
    %p103 = scmp.eq.s32.totalorder %s14, 0
    %p104 = por %p102, %p103
    %p105 = scmp.le.s32.totalorder 1, %s8
    %p106 = scmp.lt.s32.totalorder %s8, 3
    %p107 = pnand %p105, %p106
    %p108 = pneg %p107
    // Predicated region
    $region9: #{batchnorm_conv1d_stack.7} parent=5 // pred_check
      _
    $region10: #{batchnorm_conv1d_stack.7} parent=5 // pred_check_branch
      %110 = sbr.rel (%p107) target = $region12
    $region11: #{batchnorm_conv1d_stack.7} parent=5 // pred_region
      %s111 = ssub.s32 %s8, 1
      // Predicated region
      $region13: #{batchnorm_conv1d_stack.7} parent=11 // pred_check
        %p112 = pneg %p41
      $region14: #{batchnorm_conv1d_stack.7} parent=11 // pred_check_branch
        %114 = sbr.rel (%p112) target = $region16
      $region15: #{batchnorm_conv1d_stack.7} parent=11 // pred_region
        _
      $region16: #{batchnorm_conv1d_stack.7} parent=11 // pred_fallthru
        _
    $region12: #{batchnorm_conv1d_stack.7} parent=5 // pred_fallthru
      _
    %p115 = scmp.lt.s32.totalorder %s8, 2
    // Predicated region
    $region17: #{batchnorm_conv1d_stack.7} parent=5 // pred_check
      %p116 = pneg %p115
    $region18: #{batchnorm_conv1d_stack.7} parent=5 // pred_check_branch
      %118 = sbr.rel (%p116) target = $region20
    $region19: #{batchnorm_conv1d_stack.7} parent=5 // pred_region
      // Predicated region
      $region21: #{batchnorm_conv1d_stack.7} parent=19 // pred_check
        %p119 = pneg %p63
      $region22: #{batchnorm_conv1d_stack.7} parent=19 // pred_check_branch
        %121 = sbr.rel (%p119) target = $region24
      $region23: #{batchnorm_conv1d_stack.7} parent=19 // pred_region
        %s122 = smul.u32 2, %s16
        %p123 = scmp.lt.s32.totalorder %s15, 1
        %s124 = scalar_select %p123, %s15, 1
        %p125 = scmp.lt.s32.totalorder %s122, 1
        %s126 = scalar_select %p125, %s122, 1
        %s127 = smul.addr %s124, 2
        %s128 = sadd.s32 %s126, %s127
        %s129 = smul.addr %s128, 8
        %s130 = scalar_lea.vmem %s1, %s129
        %s131 = smul.u32 2, %s16
      $region24: #{batchnorm_conv1d_stack.7} parent=19 // pred_fallthru
        _
    $region20: #{batchnorm_conv1d_stack.7} parent=5 // pred_fallthru
      _
    %p132 = scmp.le.s32.totalorder 1, %s8
    %p133 = scmp.lt.s32.totalorder %s8, 3
    %p134 = pnand %p132, %p133
    %p135 = pneg %p134
    // Predicated region
    $region25: #{batchnorm_conv1d_stack.7} parent=5 // pred_check
      _
    $region26: #{batchnorm_conv1d_stack.7} parent=5 // pred_check_branch
      %137 = sbr.rel (%p134) target = $region28
    $region27: #{batchnorm_conv1d_stack.7} parent=5 // pred_region
      %s138 = ssub.s32 %s8, 1
      %p139 = pneg %p41
      %p140 = pneg %p38
      %s141 = smul.u32 2, %s18
      %p142 = scmp.lt.s32.totalorder %s17, 1
      %s143 = scalar_select %p142, %s17, 1
      %p144 = scmp.lt.s32.totalorder %s141, 1
      %s145 = scalar_select %p144, %s141, 1
      %s146 = smul.addr %s143, 2
      %s147 = sadd.s32 %s145, %s146
      %s148 = smul.addr %s147, 8
      %s149 = scalar_lea.vmem %s1, %s148
      %p150 = pneg %p69
      %p151 = pneg %p66
      %p152 = pneg %p97
      %p153 = pneg %p94
      %s154 = smul.u32 2, %s18
      %p155 = scmp.lt.s32.totalorder %s17, 1
      %s156 = scalar_select %p155, %s17, 1
      %p157 = scmp.lt.s32.totalorder %s154, 1
      %s158 = scalar_select %p157, %s154, 1
      %s159 = smul.addr %s156, 2
      %s160 = sadd.s32 %s158, %s159
      %s161 = smul.addr %s160, 8
      %s162 = scalar_lea.vmem %s2, %s161
      %s163 = smul.u32 2, %s18
      %p164 = scmp.lt.s32.totalorder %s17, 1
      %s165 = scalar_select %p164, %s17, 1
      %p166 = scmp.lt.s32.totalorder %s163, 1
      %s167 = scalar_select %p166, %s163, 1
      %s168 = smul.addr %s165, 2
      %s169 = sadd.s32 %s167, %s168
      %s170 = smul.addr %s169, 8
      %s171 = scalar_lea.vmem %s1, %s170
      %s172 = smul.u32 2, %s18
      %s173 = smul.u32 2, %s18
      %p174 = scmp.lt.s32.totalorder %s17, 1
      %s175 = scalar_select %p174, %s17, 1
      %p176 = scmp.lt.s32.totalorder %s173, 1
      %s177 = scalar_select %p176, %s173, 1
      %s178 = smul.addr %s175, 2
      %s179 = sadd.s32 %s177, %s178
      %s180 = smul.addr %s179, 8
      %s181 = scalar_lea.vmem %s2, %s180
      %s182 = smul.u32 2, %s18
      %v183 = vld [vmem:[%s171] sm:$0xff]
      %v184 = vld [vmem:[%s171 + $0x8] sm:$0xff]
      %v185 = vld [vmem:[%s0] sm:$0x1]
      %v186 = vlaneseq
      %v187 = vshrl.u32 %v186, 7
      %v188 = vsub.s32 0, %v187
      %v189 = vrot.slane %v185, %v188
      %v190 = vmul.f32 %v183, %v189
      %v191 = vmul.f32 %v184, %v189
      %v192 = vld [vmem:[%s0 + $0x1] sm:$0x1]
      %v193 = vlaneseq
      %v194 = vshrl.u32 %v193, 7
      %v195 = vsub.s32 0, %v194
      %v196 = vrot.slane %v192, %v195
      %v197 = vadd.f32 %v190, %v196
      %v198 = vadd.f32 %v191, %v196
      %199 = vst [vmem:[%s181] sm:$0xff] %v197
      %200 = vst [vmem:[%s181 + $0x8] sm:$0xff] %v198
      %s201 = smul.u32 2, %s18
      %p202 = scmp.lt.s32.totalorder %s17, 1
      %s203 = scalar_select %p202, %s17, 1
      %p204 = scmp.lt.s32.totalorder %s201, 1
      %s205 = scalar_select %p204, %s201, 1
      %s206 = smul.addr %s203, 2
      %s207 = sadd.s32 %s205, %s206
      %s208 = smul.addr %s207, 8
      %s209 = scalar_lea.vmem %s2, %s208
      // Predicated region
      $region29: #{batchnorm_conv1d_stack.7} parent=27 // pred_check
        %p210 = pneg %p94
      $region30: #{batchnorm_conv1d_stack.7} parent=27 // pred_check_branch
        %212 = sbr.rel (%p210) target = $region32
      $region31: #{batchnorm_conv1d_stack.7} parent=27 // pred_region
        %s213 = smul.u32 2, %s18
      $region32: #{batchnorm_conv1d_stack.7} parent=27 // pred_fallthru
        _
    $region28: #{batchnorm_conv1d_stack.7} parent=5 // pred_fallthru
      _
    %p214 = scmp.le.s32.totalorder 2, %s8
    // Predicated region
    $region33: #{batchnorm_conv1d_stack.7} parent=5 // pred_check
      %p215 = pneg %p214
    $region34: #{batchnorm_conv1d_stack.7} parent=5 // pred_check_branch
      %217 = sbr.rel (%p215) target = $region36
    $region35: #{batchnorm_conv1d_stack.7} parent=5 // pred_region
      %s218 = ssub.s32 %s8, 2
      // Predicated region
      $region37: #{batchnorm_conv1d_stack.7} parent=35 // pred_check
        %p219 = pneg %p100
      $region38: #{batchnorm_conv1d_stack.7} parent=35 // pred_check_branch
        %221 = sbr.rel (%p219) target = $region40
      $region39: #{batchnorm_conv1d_stack.7} parent=35 // pred_region
        %s222 = smul.u32 2, %s20
        %p223 = scmp.lt.s32.totalorder %s19, 1
        %s224 = scalar_select %p223, %s19, 1
        %p225 = scmp.lt.s32.totalorder %s222, 1
        %s226 = scalar_select %p225, %s222, 1
        %s227 = smul.addr %s224, 2
        %s228 = sadd.s32 %s226, %s227
        %s229 = smul.addr %s228, 8
        %s230 = scalar_lea.vmem %s2, %s229
      $region40: #{batchnorm_conv1d_stack.7} parent=35 // pred_fallthru
        _
    $region36: #{batchnorm_conv1d_stack.7} parent=5 // pred_fallthru
      _
  $region6: #{batchnorm_conv1d_stack.7} parent=0 // loop_footer
    %s12 = sadd.s32 1, %s8
  $region7: #{batchnorm_conv1d_stack.7} parent=0 // loop_footer_branch
    %7 = sbr.rel target = $region3
  $region8: #{batchnorm_conv1d_stack.7} parent=0 // loop_exit
    _

// kernel: batchnorm_conv1d_stack.4
$region0: #{batchnorm_conv1d_stack.4}
  #allocation0 [shape = 'u32[]', space=smem, size = 0x4, offset = 0x4, fixed_abs, tag = 'smem constant byte address 0x4 - core index']
  #allocation1 [shape = 'u32[144,128]{1,0:T(1,128)}', space=vmem, size = 0x12000, scoped, tag = 'internal scratch']
  #allocation2 [shape = 'f32[24,128]{1,0:T(8,128)}', space=vmem, size = 0x3000, scoped, tag = 'scratch operand']
  %s0 = inlined_call_operand.vmem [shape: f32[2,128], index: 0, kind: input, shape index: {}]
  %s1 = inlined_call_operand.vmem [shape: f32[2,24,128], index: 1, kind: input, shape index: {}, may-alias: {1,2}]
  %s2 = inlined_call_operand.vmem [shape: f32[2,24,128], index: 2, kind: input, shape index: {}, may-alias: {1,2}]
  %s3 = inlined_call_operand.vmem [shape: f32[3,128,128], index: 3, kind: input, shape index: {}]
  %s4 = inlined_call_operand.vmem [shape: f32[2,16,128], index: 4, kind: output, shape index: {0}]
  %s5 = inlined_call_operand.vmem [shape: f32[2,1,2,128], index: 5, kind: output, shape index: {1}]
  %6 = xla_tuple %s4, %s5
  %s7 = sld [smem:[#allocation0]]
  $region57: #{batchnorm_conv1d_stack.4} parent=0
    _
  %s9 = ssub.s32 1, %s7
  %s10 = scalar_select 0, %s9, %s7
  loop: start=0, step=1, limit=4
  $region2: #{batchnorm_conv1d_stack.4} parent=0 // loop_pre_header
    _
  $region3: #{batchnorm_conv1d_stack.4} parent=0 // loop_header
    %s12 = sphi 0, %s16
    %p13 = scmp.ge.s32.totalorder %s12, 4
    %s19 = sphi 0, %s31
    %s20 = sphi 0, %s27
    %s21 = sphi 0, %s19
    %s22 = sphi 0, %s20
    %s23 = sphi 0, %s21
    %s24 = sphi 0, %s22
    %s32 = sphi 0, %s32
    %s34 = sphi 0, %s32
    %s35 = sphi 0, %s34
    %s49 = sphi 0, %s35
    %s57 = sphi 0, %s59
    %s60 = sphi 0, %s57
    %s61 = sphi 0, %s60
    %s77 = sphi 0, %s61
    %s89 = sphi 0, %s91
    %s92 = sphi 0, %s89
    %s93 = sphi 0, %s92
    %s109 = sphi 0, %s93
    %s113 = sphi 0, %s113
    %s115 = sphi 0, %s113
    %s116 = sphi 0, %s115
    %s130 = sphi 0, %s116
    %s138 = sphi 0, %s140
    %s141 = sphi 0, %s138
    %s142 = sphi 0, %s141
    %s158 = sphi 0, %s142
    %s166 = sphi 0, %s168
    %s169 = sphi 0, %s166
    %s170 = sphi 0, %s169
    %s186 = sphi 0, %s170
  $region4: #{batchnorm_conv1d_stack.4} parent=0 // loop_header_branch
    %15 = sbr.rel (%p13) target = $region8
  $region5: #{batchnorm_conv1d_stack.4} parent=0 // loop_body
    %s17 = ssub.s32 %s12, 1
    %s18 = ssub.s32 %s12, 2
    %s25 = sadd.s32 1, %s20
    %p26 = scmp.ge.s32.totalorder %s25, 1
    %s27 = scalar_select %p26, 0, %s25
    %s28 = sadd.s32 1, %s19
    %s29 = scalar_select %p26, %s28, %s19
    %p30 = scmp.ge.s32.totalorder %s29, 2
    %s31 = scalar_select %p30, 0, %s29
    %s33 = sadd.s32 %s32, 1
    %p36 = scmp.eq.s32.totalorder %s12, 1
    %p37 = scmp.ne.s32.totalorder %s32, %s34
    %p38 = scmp.eq.s32.totalorder %s12, 0
    %p39 = por %p37, %p38
    %p40 = scmp.ne.s32.totalorder %s32, %s34
    %p41 = scmp.eq.s32.totalorder %s17, 1
    %p42 = por %p40, %p41
    %p43 = scmp.ne.s32.totalorder %s34, %s35
    %p44 = scmp.eq.s32.totalorder %s17, 0
    %p45 = por %p43, %p44
    %p46 = scmp.ne.s32.totalorder %s34, %s35
    %p47 = scmp.eq.s32.totalorder %s18, 1
    %p48 = por %p46, %p47
    %p50 = scmp.ne.s32.totalorder %s35, %s49
    %p51 = scmp.eq.s32.totalorder %s18, 0
    %p52 = por %p50, %p51
    %s53 = ssub.s32 %s19, %s31
    %s54 = ssub.s32 %s20, %s27
    %s55 = sor.u32 %s53, %s54
    %p56 = scmp.eq.s32.totalorder %s55, 0
    %s58 = sadd.s32 %s57, 1
    %s59 = scalar_select %p56, %s57, %s58
    %p62 = pneg %p56
    %p63 = scmp.eq.s32.totalorder %s12, 1
    %p64 = por %p62, %p63
    %p65 = scmp.ne.s32.totalorder %s57, %s60
    %p66 = scmp.eq.s32.totalorder %s12, 0
    %p67 = por %p65, %p66
    %p68 = scmp.ne.s32.totalorder %s57, %s60
    %p69 = scmp.eq.s32.totalorder %s17, 1
    %p70 = por %p68, %p69
    %p71 = scmp.ne.s32.totalorder %s60, %s61
    %p72 = scmp.eq.s32.totalorder %s17, 0
    %p73 = por %p71, %p72
    %p74 = scmp.ne.s32.totalorder %s60, %s61
    %p75 = scmp.eq.s32.totalorder %s18, 1
    %p76 = por %p74, %p75
    %p78 = scmp.ne.s32.totalorder %s61, %s77
    %p79 = scmp.eq.s32.totalorder %s18, 0
    %p80 = por %p78, %p79
    %s81 = sadd.s32 %s20, 1
    %s82 = smul.u32 %s81, 2
    %s83 = sadd.s32 %s27, 1
    %s84 = smul.u32 %s83, 2
    %s85 = ssub.s32 %s19, %s31
    %s86 = ssub.s32 %s82, %s84
    %s87 = sor.u32 %s85, %s86
    %p88 = scmp.eq.s32.totalorder %s87, 0
    %s90 = sadd.s32 %s89, 1
    %s91 = scalar_select %p88, %s89, %s90
    %p94 = pneg %p88
    %p95 = scmp.eq.s32.totalorder %s12, 1
    %p96 = por %p94, %p95
    %p97 = scmp.ne.s32.totalorder %s89, %s92
    %p98 = scmp.eq.s32.totalorder %s12, 0
    %p99 = por %p97, %p98
    %p100 = scmp.ne.s32.totalorder %s89, %s92
    %p101 = scmp.eq.s32.totalorder %s17, 1
    %p102 = por %p100, %p101
    %p103 = scmp.ne.s32.totalorder %s92, %s93
    %p104 = scmp.eq.s32.totalorder %s17, 0
    %p105 = por %p103, %p104
    %p106 = scmp.ne.s32.totalorder %s92, %s93
    %p107 = scmp.eq.s32.totalorder %s18, 1
    %p108 = por %p106, %p107
    %p110 = scmp.ne.s32.totalorder %s93, %s109
    %p111 = scmp.eq.s32.totalorder %s18, 0
    %p112 = por %p110, %p111
    %s114 = sadd.s32 %s113, 1
    %p117 = scmp.eq.s32.totalorder %s12, 1
    %p118 = scmp.ne.s32.totalorder %s113, %s115
    %p119 = scmp.eq.s32.totalorder %s12, 0
    %p120 = por %p118, %p119
    %p121 = scmp.ne.s32.totalorder %s113, %s115
    %p122 = scmp.eq.s32.totalorder %s17, 1
    %p123 = por %p121, %p122
    %p124 = scmp.ne.s32.totalorder %s115, %s116
    %p125 = scmp.eq.s32.totalorder %s17, 0
    %p126 = por %p124, %p125
    %p127 = scmp.ne.s32.totalorder %s115, %s116
    %p128 = scmp.eq.s32.totalorder %s18, 1
    %p129 = por %p127, %p128
    %p131 = scmp.ne.s32.totalorder %s116, %s130
    %p132 = scmp.eq.s32.totalorder %s18, 0
    %p133 = por %p131, %p132
    %s134 = ssub.s32 %s19, %s31
    %s135 = ssub.s32 %s20, %s27
    %s136 = sor.u32 %s134, %s135
    %p137 = scmp.eq.s32.totalorder %s136, 0
    %s139 = sadd.s32 %s138, 1
    %s140 = scalar_select %p137, %s138, %s139
    %p143 = pneg %p137
    %p144 = scmp.eq.s32.totalorder %s12, 1
    %p145 = por %p143, %p144
    %p146 = scmp.ne.s32.totalorder %s138, %s141
    %p147 = scmp.eq.s32.totalorder %s12, 0
    %p148 = por %p146, %p147
    %p149 = scmp.ne.s32.totalorder %s138, %s141
    %p150 = scmp.eq.s32.totalorder %s17, 1
    %p151 = por %p149, %p150
    %p152 = scmp.ne.s32.totalorder %s141, %s142
    %p153 = scmp.eq.s32.totalorder %s17, 0
    %p154 = por %p152, %p153
    %p155 = scmp.ne.s32.totalorder %s141, %s142
    %p156 = scmp.eq.s32.totalorder %s18, 1
    %p157 = por %p155, %p156
    %p159 = scmp.ne.s32.totalorder %s142, %s158
    %p160 = scmp.eq.s32.totalorder %s18, 0
    %p161 = por %p159, %p160
    %s162 = ssub.s32 %s19, %s31
    %s163 = ssub.s32 %s20, %s27
    %s164 = sor.u32 %s162, %s163
    %p165 = scmp.eq.s32.totalorder %s164, 0
    %s167 = sadd.s32 %s166, 1
    %s168 = scalar_select %p165, %s166, %s167
    %p171 = pneg %p165
    %p172 = scmp.eq.s32.totalorder %s12, 1
    %p173 = por %p171, %p172
    %p174 = scmp.ne.s32.totalorder %s166, %s169
    %p175 = scmp.eq.s32.totalorder %s12, 0
    %p176 = por %p174, %p175
    %p177 = scmp.ne.s32.totalorder %s166, %s169
    %p178 = scmp.eq.s32.totalorder %s17, 1
    %p179 = por %p177, %p178
    %p180 = scmp.ne.s32.totalorder %s169, %s170
    %p181 = scmp.eq.s32.totalorder %s17, 0
    %p182 = por %p180, %p181
    %p183 = scmp.ne.s32.totalorder %s169, %s170
    %p184 = scmp.eq.s32.totalorder %s18, 1
    %p185 = por %p183, %p184
    %p187 = scmp.ne.s32.totalorder %s170, %s186
    %p188 = scmp.eq.s32.totalorder %s18, 0
    %p189 = por %p187, %p188
    %p190 = scmp.le.s32.totalorder 1, %s12
    %p191 = scmp.lt.s32.totalorder %s12, 3
    %p192 = pnand %p190, %p191
    %p193 = pneg %p192
    // Predicated region
    $region9: #{batchnorm_conv1d_stack.4} parent=5 // pred_check
      _
    $region10: #{batchnorm_conv1d_stack.4} parent=5 // pred_check_branch
      %195 = sbr.rel (%p192) target = $region12
    $region11: #{batchnorm_conv1d_stack.4} parent=5 // pred_region
      %s196 = ssub.s32 %s12, 1
      // Predicated region
      $region13: #{batchnorm_conv1d_stack.4} parent=11 // pred_check
        %p197 = pneg %p45
      $region14: #{batchnorm_conv1d_stack.4} parent=11 // pred_check_branch
        %199 = sbr.rel (%p197) target = $region16
      $region15: #{batchnorm_conv1d_stack.4} parent=11 // pred_region
        _
      $region16: #{batchnorm_conv1d_stack.4} parent=11 // pred_fallthru
        _
      // Predicated region
      $region17: #{batchnorm_conv1d_stack.4} parent=11 // pred_check
        %p200 = pneg %p126
      $region18: #{batchnorm_conv1d_stack.4} parent=11 // pred_check_branch
        %202 = sbr.rel (%p200) target = $region20
      $region19: #{batchnorm_conv1d_stack.4} parent=11 // pred_region
        _
      $region20: #{batchnorm_conv1d_stack.4} parent=11 // pred_fallthru
        _
    $region12: #{batchnorm_conv1d_stack.4} parent=5 // pred_fallthru
      _
    %p203 = scmp.lt.s32.totalorder %s12, 2
    // Predicated region
    $region21: #{batchnorm_conv1d_stack.4} parent=5 // pred_check
      %p204 = pneg %p203
    $region22: #{batchnorm_conv1d_stack.4} parent=5 // pred_check_branch
      %206 = sbr.rel (%p204) target = $region24
    $region23: #{batchnorm_conv1d_stack.4} parent=5 // pred_region
      // Predicated region
      $region25: #{batchnorm_conv1d_stack.4} parent=23 // pred_check
        %p207 = pneg %p67
      $region26: #{batchnorm_conv1d_stack.4} parent=23 // pred_check_branch
        %209 = sbr.rel (%p207) target = $region28
      $region27: #{batchnorm_conv1d_stack.4} parent=23 // pred_region
        %s210 = smul.u32 2, %s20
        %s211 = ssub.s32 3, %s210
        %p212 = scmp.lt.s32.totalorder %s211, 2
        %s213 = scalar_select %p212, %s211, 2
        %s214 = smul.u32 128, %s213
        %p215 = scmp.lt.s32.totalorder %s19, 1
        %s216 = scalar_select %p215, %s19, 1
        %p217 = scmp.lt.s32.totalorder %s210, 2
        %s218 = scalar_select %p217, %s210, 2
        %s219 = smul.addr %s216, 3
        %s220 = sadd.s32 %s218, %s219
        %s221 = smul.addr %s220, 8
        %s222 = scalar_lea.vmem %s1, %s221
        %s223 = smul.u32 2, %s20
        %s224 = ssub.s32 3, %s223
        %p225 = scmp.lt.s32.totalorder %s224, 2
        %s226 = scalar_select %p225, %s224, 2
        %s227 = smul.u32 128, %s226
      $region28: #{batchnorm_conv1d_stack.4} parent=23 // pred_fallthru
        _
      // Predicated region
      $region29: #{batchnorm_conv1d_stack.4} parent=23 // pred_check
        %p228 = pneg %p99
      $region30: #{batchnorm_conv1d_stack.4} parent=23 // pred_check_branch
        %230 = sbr.rel (%p228) target = $region32
      $region31: #{batchnorm_conv1d_stack.4} parent=23 // pred_region
        %s231 = sadd.s32 %s20, 1
        %s232 = smul.u32 %s231, 2
        %p233 = scmp.lt.s32.totalorder %s19, 1
        %s234 = scalar_select %p233, %s19, 1
        %p235 = scmp.lt.s32.totalorder %s232, 2
        %s236 = scalar_select %p235, %s232, 2
        %s237 = smul.addr %s234, 3
        %s238 = sadd.s32 %s236, %s237
        %s239 = smul.addr %s238, 8
        %s240 = scalar_lea.vmem %s2, %s239
        %s241 = sadd.s32 %s20, 1
        %s242 = smul.u32 %s241, 2
      $region32: #{batchnorm_conv1d_stack.4} parent=23 // pred_fallthru
        _
    $region24: #{batchnorm_conv1d_stack.4} parent=5 // pred_fallthru
      _
    %p243 = scmp.le.s32.totalorder 1, %s12
    %p244 = scmp.lt.s32.totalorder %s12, 3
    %p245 = pnand %p243, %p244
    %p246 = pneg %p245
    // Predicated region
    $region33: #{batchnorm_conv1d_stack.4} parent=5 // pred_check
      _
    $region34: #{batchnorm_conv1d_stack.4} parent=5 // pred_check_branch
      %248 = sbr.rel (%p245) target = $region36
    $region35: #{batchnorm_conv1d_stack.4} parent=5 // pred_region
      %s249 = ssub.s32 %s12, 1
      %p250 = pneg %p45
      %p251 = pneg %p42
      %s252 = smul.u32 2, %s22
      %s253 = ssub.s32 3, %s252
      %p254 = scmp.lt.s32.totalorder %s253, 2
      %s255 = scalar_select %p254, %s253, 2
      %s256 = smul.u32 128, %s255
      %p257 = scmp.lt.s32.totalorder %s21, 1
      %s258 = scalar_select %p257, %s21, 1
      %p259 = scmp.lt.s32.totalorder %s252, 2
      %s260 = scalar_select %p259, %s252, 2
      %s261 = smul.addr %s258, 3
      %s262 = sadd.s32 %s260, %s261
      %s263 = smul.addr %s262, 8
      %s264 = scalar_lea.vmem %s1, %s263
      %p265 = pneg %p73
      %p266 = pneg %p70
      %s267 = sadd.s32 %s22, 1
      %s268 = smul.u32 %s267, 2
      %p269 = scmp.lt.s32.totalorder %s21, 1
      %s270 = scalar_select %p269, %s21, 1
      %p271 = scmp.lt.s32.totalorder %s268, 2
      %s272 = scalar_select %p271, %s268, 2
      %s273 = smul.addr %s270, 3
      %s274 = sadd.s32 %s272, %s273
      %s275 = smul.addr %s274, 8
      %s276 = scalar_lea.vmem %s2, %s275
      %p277 = pneg %p105
      %p278 = pneg %p102
      %p279 = pneg %p126
      %p280 = pneg %p123
      %p281 = pneg %p154
      %p282 = pneg %p151
      %s283 = smul.u32 2, %s22
      %p284 = scmp.lt.s32.totalorder %s21, 1
      %s285 = scalar_select %p284, %s21, 1
      %p286 = scmp.lt.s32.totalorder %s283, 1
      %s287 = scalar_select %p286, %s283, 1
      %s288 = smul.addr %s285, 2
      %s289 = sadd.s32 %s287, %s288
      %s290 = smul.addr %s289, 8
      %s291 = scalar_lea.vmem %s4, %s290
      %p292 = pneg %p182
      %p293 = pneg %p179
      %p294 = scmp.lt.s32.totalorder %s21, 1
      %s295 = scalar_select %p294, %s21, 1
      %p296 = scmp.lt.s32.totalorder %s22, 0
      %s297 = scalar_select %p296, %s22, 0
      %s298 = sadd.s32 %s297, %s295
      %s299 = smul.addr %s298, 2
      %s300 = scalar_lea.vmem %s5, %s299
      %s301 = smul.u32 2, %s22
      %s302 = ssub.s32 3, %s301
      %p303 = scmp.lt.s32.totalorder %s302, 2
      %s304 = scalar_select %p303, %s302, 2
      %s305 = smul.u32 128, %s304
      %p306 = scmp.lt.s32.totalorder %s21, 1
      %s307 = scalar_select %p306, %s21, 1
      %p308 = scmp.lt.s32.totalorder %s301, 2
      %s309 = scalar_select %p308, %s301, 2
      %s310 = smul.addr %s307, 3
      %s311 = sadd.s32 %s309, %s310
      %s312 = smul.addr %s311, 8
      %s313 = scalar_lea.vmem %s1, %s312
      %s314 = smul.u32 2, %s22
      %s315 = ssub.s32 3, %s314
      %p316 = scmp.lt.s32.totalorder %s315, 2
      %s317 = scalar_select %p316, %s315, 2
      %s318 = smul.u32 128, %s317
      %s319 = sadd.s32 %s22, 1
      %s320 = smul.u32 %s319, 2
      %p321 = scmp.lt.s32.totalorder %s21, 1
      %s322 = scalar_select %p321, %s21, 1
      %p323 = scmp.lt.s32.totalorder %s320, 2
      %s324 = scalar_select %p323, %s320, 2
      %s325 = smul.addr %s322, 3
      %s326 = sadd.s32 %s324, %s325
      %s327 = smul.addr %s326, 8
      %s328 = scalar_lea.vmem %s2, %s327
      %s329 = sadd.s32 %s22, 1
      %s330 = smul.u32 %s329, 2
      %s331 = smul.u32 2, %s22
      %p332 = scmp.lt.s32.totalorder %s21, 1
      %s333 = scalar_select %p332, %s21, 1
      %p334 = scmp.lt.s32.totalorder %s331, 1
      %s335 = scalar_select %p334, %s331, 1
      %s336 = smul.addr %s333, 2
      %s337 = sadd.s32 %s335, %s336
      %s338 = smul.addr %s337, 8
      %s339 = scalar_lea.vmem %s4, %s338
      %s340 = smul.u32 2, %s22
      %p341 = scmp.lt.s32.totalorder %s21, 1
      %s342 = scalar_select %p341, %s21, 1
      %p343 = scmp.lt.s32.totalorder %s22, 0
      %s344 = scalar_select %p343, %s22, 0
      %s345 = sadd.s32 %s344, %s342
      %s346 = smul.addr %s345, 2
      %s347 = scalar_lea.vmem %s5, %s346
      %s348 = smul.u32 %s22, 16
      %v349 = vld [vmem:[%s0] sm:$0x1]
      %v350 = vld [vmem:[%s0 + $0x1] sm:$0x1]
      %v351 = vld [vmem:[%s313] sm:$0xff]
      %v352 = vld [vmem:[%s313 + $0x8] sm:$0xff]
      %v353 = vlaneseq
      %v354 = vshrl.u32 %v353, 7
      %v355 = vadd.s32 %v354, 8
      %v356 = vstv %s348
      %v357 = vadd.s32 %v354, %v356
      %v358 = vadd.s32 %v355, %v356
      %vm359 = vcmp.ge.s32.totalorder %v357, 1
      %vm360 = vcmp.ge.s32.totalorder %v358, 1
      %vm361 = vcmp.lt.s32.totalorder %v357, 17
      %vm362 = vcmp.lt.s32.totalorder %v358, 17
      %vm363 = vmand %vm359, %vm361
      %vm364 = vmand %vm360, %vm362
      %v365 = vlaneseq
      %v366 = vshrl.u32 %v365, 7
      %v367 = vsub.s32 0, %v366
      %v368 = vrot.slane %v349, %v367
      %v369 = vmul.f32 %v351, %v368
      %v370 = vmul.f32 %v352, %v368
      %v371 = vlaneseq
      %v372 = vshrl.u32 %v371, 7
      %v373 = vsub.s32 0, %v372
      %v374 = vrot.slane %v350, %v373
      %v375 = vadd.f32 %v369, %v374
      %v376 = vadd.f32 %v370, %v374
      %v377 = vsel %vm363, 1, 0
      %v378 = vsel %vm364, 1, 0
      %vm379 = vcmp.eq.s32.totalorder %v377, 1
      %vm380 = vcmp.eq.s32.totalorder %v378, 1
      %v381 = vsel %vm379, %v375, 0.0
      %v382 = vsel %vm380, %v376, 0.0
      %383 = vst [vmem:[#allocation2] sm:$0xff] %v381
      %384 = vst [vmem:[#allocation2 + $0x8] sm:$0xff] %v382
      %v385 = vld [vmem:[%s328] sm:$0xff]
      %s386 = sadd.s32 %s348, 16
      %v387 = vstv %s386
      %v388 = vadd.s32 %v354, %v387
      %vm389 = vcmp.ge.s32.totalorder %v388, 1
      %vm390 = vcmp.lt.s32.totalorder %v388, 17
      %vm391 = vmand %vm389, %vm390
      %v392 = vmul.f32 %v385, %v368
      %v393 = vadd.f32 %v392, %v374
      %v394 = vsel %vm391, 1, 0
      %vm395 = vcmp.eq.s32.totalorder %v394, 1
      %v396 = vsel %vm395, %v393, 0.0
      %397 = vst [vmem:[#allocation2 + $0x10] sm:$0xff] %v396
      %v398 = vld [vmem:[#allocation2] sm:$0xff]
      %v399 = vld [vmem:[#allocation2 + $0x8] sm:$0xff]
      %v400 = vld [vmem:[%s3] sm:$0xff]
      %v401 = vld [vmem:[%s3 + $0x8] sm:$0xff]
      %v402 = vld [vmem:[%s3 + $0x10] sm:$0xff]
      %v403 = vld [vmem:[%s3 + $0x18] sm:$0xff]
      %v404 = vld [vmem:[%s3 + $0x20] sm:$0xff]
      %v405 = vld [vmem:[%s3 + $0x28] sm:$0xff]
      %v406 = vld [vmem:[%s3 + $0x30] sm:$0xff]
      %v407 = vld [vmem:[%s3 + $0x38] sm:$0xff]
      %v408 = vld [vmem:[%s3 + $0x40] sm:$0xff]
      %v409 = vld [vmem:[%s3 + $0x48] sm:$0xff]
      %v410 = vld [vmem:[%s3 + $0x50] sm:$0xff]
      %v411 = vld [vmem:[%s3 + $0x58] sm:$0xff]
      %v412 = vld [vmem:[%s3 + $0x60] sm:$0xff]
      %v413 = vld [vmem:[%s3 + $0x68] sm:$0xff]
      %v414 = vld [vmem:[%s3 + $0x70] sm:$0xff]
      %v415 = vld [vmem:[%s3 + $0x78] sm:$0xff]
      %v416 = vld [vmem:[#allocation2 + $0x1] sm:$0xff]
      %v417 = vld [vmem:[#allocation2 + $0x9] sm:$0xff]
      %s418 = scalar_lea.vmem %s3, 128
      %v419 = vld [vmem:[%s418] sm:$0xff]
      %v420 = vld [vmem:[%s418 + $0x8] sm:$0xff]
      %v421 = vld [vmem:[%s418 + $0x10] sm:$0xff]
      %v422 = vld [vmem:[%s418 + $0x18] sm:$0xff]
      %v423 = vld [vmem:[%s418 + $0x20] sm:$0xff]
      %v424 = vld [vmem:[%s418 + $0x28] sm:$0xff]
      %v425 = vld [vmem:[%s418 + $0x30] sm:$0xff]
      %v426 = vld [vmem:[%s418 + $0x38] sm:$0xff]
      %v427 = vld [vmem:[%s418 + $0x40] sm:$0xff]
      %v428 = vld [vmem:[%s418 + $0x48] sm:$0xff]
      %v429 = vld [vmem:[%s418 + $0x50] sm:$0xff]
      %v430 = vld [vmem:[%s418 + $0x58] sm:$0xff]
      %v431 = vld [vmem:[%s418 + $0x60] sm:$0xff]
      %v432 = vld [vmem:[%s418 + $0x68] sm:$0xff]
      %v433 = vld [vmem:[%s418 + $0x70] sm:$0xff]
      %v434 = vld [vmem:[%s418 + $0x78] sm:$0xff]
      %435 = vmatprep.subr.mxu0 0.0
      %436 = vmatpush1.msra.mxu0 %v419
      %437 = vmatprep.subr.mxu0 0.0
      %438 = vmatpush1.msra.mxu0 %v420
      %439 = vmatprep.subr.mxu0 0.0
      %440 = vmatpush1.msra.mxu0 %v421
      %441 = vmatprep.subr.mxu0 0.0
      %442 = vmatpush1.msra.mxu0 %v422
      %443 = vmatprep.subr.mxu0 0.0
      %444 = vmatpush1.msra.mxu0 %v423
      %445 = vmatprep.subr.mxu0 0.0
      %446 = vmatpush1.msra.mxu0 %v424
      %447 = vmatprep.subr.mxu0 0.0
      %448 = vmatpush1.msra.mxu0 %v425
      %449 = vmatprep.subr.mxu0 0.0
      %450 = vmatpush1.msra.mxu0 %v426
      %451 = vmatprep.subr.mxu0 0.0
      %452 = vmatpush1.msra.mxu0 %v427
      %453 = vmatprep.subr.mxu0 0.0
      %454 = vmatpush1.msra.mxu0 %v428
      %455 = vmatprep.subr.mxu0 0.0
      %456 = vmatpush1.msra.mxu0 %v429
      %457 = vmatprep.subr.mxu0 0.0
      %458 = vmatpush1.msra.mxu0 %v430
      %459 = vmatprep.subr.mxu0 0.0
      %460 = vmatpush1.msra.mxu0 %v431
      %461 = vmatprep.subr.mxu0 0.0
      %462 = vmatpush1.msra.mxu0 %v432
      %463 = vmatprep.subr.mxu0 0.0
      %464 = vmatpush1.msra.mxu0 %v433
      %465 = vmatprep.subr.mxu0 0.0
      %466 = vmatpush1.msra.mxu0 %v434
      %467 = vmatprep.subr.mxu0 0.0
      %468 = vmatpush1.msra.mxu0 0.0
      %469 = vmatprep.subr.mxu0 0.0
      %470 = vmatpush1.msra.mxu0 0.0
      %471 = vmatprep.subr.mxu0 0.0
      %472 = vmatpush1.msra.mxu0 0.0
      %473 = vmatprep.subr.mxu0 0.0
      %474 = vmatpush1.msra.mxu0 0.0
      %475 = vmatprep.subr.mxu0 0.0
      %476 = vmatpush1.msra.mxu0 0.0
      %477 = vmatprep.subr.mxu0 0.0
      %478 = vmatpush1.msra.mxu0 0.0
      %479 = vmatprep.subr.mxu0 0.0
      %480 = vmatpush1.msra.mxu0 0.0
      %481 = vmatprep.subr.mxu0 0.0
      %482 = vmatpush1.msra.mxu0 0.0
      %483 = vmatprep.subr.mxu0 0.0
      %484 = vmatpush1.msra.mxu0 0.0
      %485 = vmatprep.subr.mxu0 0.0
      %486 = vmatpush1.msra.mxu0 0.0
      %487 = vmatprep.subr.mxu0 0.0
      %488 = vmatpush1.msra.mxu0 0.0
      %489 = vmatprep.subr.mxu0 0.0
      %490 = vmatpush1.msra.mxu0 0.0
      %491 = vmatprep.subr.mxu0 0.0
      %492 = vmatpush1.msra.mxu0 0.0
      %493 = vmatprep.subr.mxu0 0.0
      %494 = vmatpush1.msra.mxu0 0.0
      %495 = vmatprep.subr.mxu0 0.0
      %496 = vmatpush1.msra.mxu0 0.0
      %497 = vmatprep.subr.mxu0 0.0
      %498 = vmatpush1.msra.mxu0 0.0
      %499 = vmatprep.mubr.f32.mxu0 0.0
      %500 = vmatmul.mubr.f32.gmra.mrb[0].mxu0 %v416
      %v501 = vpop.f32.mrb[0].mxu0
      %v502 = vadd.f32 0.0, %v501
      %v503 = vpop.f32.mrb[0].mxu0
      %504 = vmatprep.mubr.f32.mxu0 0.0
      %505 = vmatmul.mubr.f32.gmra.mrb[0].mxu0 %v417
      %v506 = vpop.f32.mrb[0].mxu0
      %v507 = vadd.f32 0.0, %v506
      %v508 = vpop.f32.mrb[0].mxu0
      %509 = vdwg.mxu0
      %510 = vmatprep.subr.mxu0 0.0
      %511 = vmatpush1.msra.mxu0 %v400
      %512 = vmatprep.subr.mxu0 0.0
      %513 = vmatpush1.msra.mxu0 %v401
      %514 = vmatprep.subr.mxu0 0.0
      %515 = vmatpush1.msra.mxu0 %v402
      %516 = vmatprep.subr.mxu0 0.0
      %517 = vmatpush1.msra.mxu0 %v403
      %518 = vmatprep.subr.mxu0 0.0
      %519 = vmatpush1.msra.mxu0 %v404
      %520 = vmatprep.subr.mxu0 0.0
      %521 = vmatpush1.msra.mxu0 %v405
      %522 = vmatprep.subr.mxu0 0.0
      %523 = vmatpush1.msra.mxu0 %v406
      %524 = vmatprep.subr.mxu0 0.0
      %525 = vmatpush1.msra.mxu0 %v407
      %526 = vmatprep.subr.mxu0 0.0
      %527 = vmatpush1.msra.mxu0 %v408
      %528 = vmatprep.subr.mxu0 0.0
      %529 = vmatpush1.msra.mxu0 %v409
      %530 = vmatprep.subr.mxu0 0.0
      %531 = vmatpush1.msra.mxu0 %v410
      %532 = vmatprep.subr.mxu0 0.0
      %533 = vmatpush1.msra.mxu0 %v411
      %534 = vmatprep.subr.mxu0 0.0
      %535 = vmatpush1.msra.mxu0 %v412
      %536 = vmatprep.subr.mxu0 0.0
      %537 = vmatpush1.msra.mxu0 %v413
      %538 = vmatprep.subr.mxu0 0.0
      %539 = vmatpush1.msra.mxu0 %v414
      %540 = vmatprep.subr.mxu0 0.0
      %541 = vmatpush1.msra.mxu0 %v415
      %542 = vmatprep.subr.mxu0 0.0
      %543 = vmatpush1.msra.mxu0 0.0
      %544 = vmatprep.subr.mxu0 0.0
      %545 = vmatpush1.msra.mxu0 0.0
      %546 = vmatprep.subr.mxu0 0.0
      %547 = vmatpush1.msra.mxu0 0.0
      %548 = vmatprep.subr.mxu0 0.0
      %549 = vmatpush1.msra.mxu0 0.0
      %550 = vmatprep.subr.mxu0 0.0
      %551 = vmatpush1.msra.mxu0 0.0
      %552 = vmatprep.subr.mxu0 0.0
      %553 = vmatpush1.msra.mxu0 0.0
      %554 = vmatprep.subr.mxu0 0.0
      %555 = vmatpush1.msra.mxu0 0.0
      %556 = vmatprep.subr.mxu0 0.0
      %557 = vmatpush1.msra.mxu0 0.0
      %558 = vmatprep.subr.mxu0 0.0
      %559 = vmatpush1.msra.mxu0 0.0
      %560 = vmatprep.subr.mxu0 0.0
      %561 = vmatpush1.msra.mxu0 0.0
      %562 = vmatprep.subr.mxu0 0.0
      %563 = vmatpush1.msra.mxu0 0.0
      %564 = vmatprep.subr.mxu0 0.0
      %565 = vmatpush1.msra.mxu0 0.0
      %566 = vmatprep.subr.mxu0 0.0
      %567 = vmatpush1.msra.mxu0 0.0
      %568 = vmatprep.subr.mxu0 0.0
      %569 = vmatpush1.msra.mxu0 0.0
      %570 = vmatprep.subr.mxu0 0.0
      %571 = vmatpush1.msra.mxu0 0.0
      %572 = vmatprep.subr.mxu0 0.0
      %573 = vmatpush1.msra.mxu0 0.0
      %574 = vmatprep.mubr.f32.mxu0 0.0
      %575 = vmatmul.mubr.f32.gmra.mrb[0].mxu0 %v398
      %v576 = vpop.f32.mrb[0].mxu0
      %v577 = vadd.f32 %v502, %v576
      %v578 = vpop.f32.mrb[0].mxu0
      %579 = vmatprep.mubr.f32.mxu0 0.0
      %580 = vmatmul.mubr.f32.gmra.mrb[0].mxu0 %v399
      %v581 = vpop.f32.mrb[0].mxu0
      %v582 = vadd.f32 %v507, %v581
      %v583 = vpop.f32.mrb[0].mxu0
      %584 = vdwg.mxu0
      %v585 = vld [vmem:[#allocation2 + $0x2] sm:$0xff]
      %v586 = vld [vmem:[#allocation2 + $0xa] sm:$0xff]
      %s587 = scalar_lea.vmem %s3, 256
      %v588 = vld [vmem:[%s587] sm:$0xff]
      %v589 = vld [vmem:[%s587 + $0x8] sm:$0xff]
      %v590 = vld [vmem:[%s587 + $0x10] sm:$0xff]
      %v591 = vld [vmem:[%s587 + $0x18] sm:$0xff]
      %v592 = vld [vmem:[%s587 + $0x20] sm:$0xff]
      %v593 = vld [vmem:[%s587 + $0x28] sm:$0xff]
      %v594 = vld [vmem:[%s587 + $0x30] sm:$0xff]
      %v595 = vld [vmem:[%s587 + $0x38] sm:$0xff]
      %v596 = vld [vmem:[%s587 + $0x40] sm:$0xff]
      %v597 = vld [vmem:[%s587 + $0x48] sm:$0xff]
      %v598 = vld [vmem:[%s587 + $0x50] sm:$0xff]
      %v599 = vld [vmem:[%s587 + $0x58] sm:$0xff]
      %v600 = vld [vmem:[%s587 + $0x60] sm:$0xff]
      %v601 = vld [vmem:[%s587 + $0x68] sm:$0xff]
      %v602 = vld [vmem:[%s587 + $0x70] sm:$0xff]
      %v603 = vld [vmem:[%s587 + $0x78] sm:$0xff]
      %604 = vmatprep.subr.mxu0 0.0
      %605 = vmatpush1.msra.mxu0 %v588
      %606 = vmatprep.subr.mxu0 0.0
      %607 = vmatpush1.msra.mxu0 %v589
      %608 = vmatprep.subr.mxu0 0.0
      %609 = vmatpush1.msra.mxu0 %v590
      %610 = vmatprep.subr.mxu0 0.0
      %611 = vmatpush1.msra.mxu0 %v591
      %612 = vmatprep.subr.mxu0 0.0
      %613 = vmatpush1.msra.mxu0 %v592
      %614 = vmatprep.subr.mxu0 0.0
      %615 = vmatpush1.msra.mxu0 %v593
      %616 = vmatprep.subr.mxu0 0.0
      %617 = vmatpush1.msra.mxu0 %v594
      %618 = vmatprep.subr.mxu0 0.0
      %619 = vmatpush1.msra.mxu0 %v595
      %620 = vmatprep.subr.mxu0 0.0
      %621 = vmatpush1.msra.mxu0 %v596
      %622 = vmatprep.subr.mxu0 0.0
      %623 = vmatpush1.msra.mxu0 %v597
      %624 = vmatprep.subr.mxu0 0.0
      %625 = vmatpush1.msra.mxu0 %v598
      %626 = vmatprep.subr.mxu0 0.0
      %627 = vmatpush1.msra.mxu0 %v599
      %628 = vmatprep.subr.mxu0 0.0
      %629 = vmatpush1.msra.mxu0 %v600
      %630 = vmatprep.subr.mxu0 0.0
      %631 = vmatpush1.msra.mxu0 %v601
      %632 = vmatprep.subr.mxu0 0.0
      %633 = vmatpush1.msra.mxu0 %v602
      %634 = vmatprep.subr.mxu0 0.0
      %635 = vmatpush1.msra.mxu0 %v603
      %636 = vmatprep.subr.mxu0 0.0
      %637 = vmatpush1.msra.mxu0 0.0
      %638 = vmatprep.subr.mxu0 0.0
      %639 = vmatpush1.msra.mxu0 0.0
      %640 = vmatprep.subr.mxu0 0.0
      %641 = vmatpush1.msra.mxu0 0.0
      %642 = vmatprep.subr.mxu0 0.0
      %643 = vmatpush1.msra.mxu0 0.0
      %644 = vmatprep.subr.mxu0 0.0
      %645 = vmatpush1.msra.mxu0 0.0
      %646 = vmatprep.subr.mxu0 0.0
      %647 = vmatpush1.msra.mxu0 0.0
      %648 = vmatprep.subr.mxu0 0.0
      %649 = vmatpush1.msra.mxu0 0.0
      %650 = vmatprep.subr.mxu0 0.0
      %651 = vmatpush1.msra.mxu0 0.0
      %652 = vmatprep.subr.mxu0 0.0
      %653 = vmatpush1.msra.mxu0 0.0
      %654 = vmatprep.subr.mxu0 0.0
      %655 = vmatpush1.msra.mxu0 0.0
      %656 = vmatprep.subr.mxu0 0.0
      %657 = vmatpush1.msra.mxu0 0.0
      %658 = vmatprep.subr.mxu0 0.0
      %659 = vmatpush1.msra.mxu0 0.0
      %660 = vmatprep.subr.mxu0 0.0
      %661 = vmatpush1.msra.mxu0 0.0
      %662 = vmatprep.subr.mxu0 0.0
      %663 = vmatpush1.msra.mxu0 0.0
      %664 = vmatprep.subr.mxu0 0.0
      %665 = vmatpush1.msra.mxu0 0.0
      %666 = vmatprep.subr.mxu0 0.0
      %667 = vmatpush1.msra.mxu0 0.0
      %668 = vmatprep.mubr.f32.mxu0 0.0
      %669 = vmatmul.mubr.f32.gmra.mrb[0].mxu0 %v585
      %v670 = vpop.f32.mrb[0].mxu0
      %v671 = vadd.f32 0.0, %v670
      %v672 = vpop.f32.mrb[0].mxu0
      %673 = vmatprep.mubr.f32.mxu0 0.0
      %674 = vmatmul.mubr.f32.gmra.mrb[0].mxu0 %v586
      %v675 = vpop.f32.mrb[0].mxu0
      %v676 = vadd.f32 0.0, %v675
      %v677 = vpop.f32.mrb[0].mxu0
      %678 = vdwg.mxu0
      %v679 = vadd.f32 %v577, %v671
      %v680 = vadd.f32 %v582, %v676
      %v681 = vmax.f32 %v679, 0.0
      %v682 = vmax.f32 %v680, 0.0
      %683 = vst [vmem:[%s339] sm:$0xff] %v681
      %684 = vst [vmem:[%s339 + $0x8] sm:$0xff] %v682
      %v685 = vadd.f32 %v681, %v682
      %v686 = vrot.slane %v685, 4
      %v687 = vadd.f32 %v685, %v686
      %v688 = vrot.slane %v687, 2
      %v689 = vadd.f32 %v687, %v688
      %v690 = vrot.slane %v689, 1
      %v691 = vadd.f32 %v689, %v690
      %692 = vst [vmem:[%s347] sm:$0x1] %v691
      %v693 = vmul.f32 %v681, %v681
      %v694 = vmul.f32 %v682, %v682
      %v695 = vadd.f32 %v693, %v694
      %v696 = vrot.slane %v695, 4
      %v697 = vadd.f32 %v695, %v696
      %v698 = vrot.slane %v697, 2
      %v699 = vadd.f32 %v697, %v698
      %v700 = vrot.slane %v699, 1
      %v701 = vadd.f32 %v699, %v700
      %702 = vst [vmem:[%s347 + $0x1] sm:$0x1] %v701
      %s703 = smul.u32 2, %s22
      %p704 = scmp.lt.s32.totalorder %s21, 1
      %s705 = scalar_select %p704, %s21, 1
      %p706 = scmp.lt.s32.totalorder %s703, 1
      %s707 = scalar_select %p706, %s703, 1
      %s708 = smul.addr %s705, 2
      %s709 = sadd.s32 %s707, %s708
      %s710 = smul.addr %s709, 8
      %s711 = scalar_lea.vmem %s4, %s710
      %p712 = scmp.lt.s32.totalorder %s21, 1
      %s713 = scalar_select %p712, %s21, 1
      %p714 = scmp.lt.s32.totalorder %s22, 0
      %s715 = scalar_select %p714, %s22, 0
      %s716 = sadd.s32 %s715, %s713
      %s717 = smul.addr %s716, 2
      %s718 = scalar_lea.vmem %s5, %s717
      // Predicated region
      $region37: #{batchnorm_conv1d_stack.4} parent=35 // pred_check
        %p719 = pneg %p151
      $region38: #{batchnorm_conv1d_stack.4} parent=35 // pred_check_branch
        %721 = sbr.rel (%p719) target = $region40
      $region39: #{batchnorm_conv1d_stack.4} parent=35 // pred_region
        %s722 = smul.u32 2, %s22
      $region40: #{batchnorm_conv1d_stack.4} parent=35 // pred_fallthru
        _
      // Predicated region
      $region41: #{batchnorm_conv1d_stack.4} parent=35 // pred_check
        %p723 = pneg %p179
      $region42: #{batchnorm_conv1d_stack.4} parent=35 // pred_check_branch
        %725 = sbr.rel (%p723) target = $region44
      $region43: #{batchnorm_conv1d_stack.4} parent=35 // pred_region
        _
      $region44: #{batchnorm_conv1d_stack.4} parent=35 // pred_fallthru
        _
    $region36: #{batchnorm_conv1d_stack.4} parent=5 // pred_fallthru
      _
    %p726 = scmp.le.s32.totalorder 2, %s12
    // Predicated region
    $region45: #{batchnorm_conv1d_stack.4} parent=5 // pred_check
      %p727 = pneg %p726
    $region46: #{batchnorm_conv1d_stack.4} parent=5 // pred_check_branch
      %729 = sbr.rel (%p727) target = $region48
    $region47: #{batchnorm_conv1d_stack.4} parent=5 // pred_region
      %s730 = ssub.s32 %s12, 2
      // Predicated region
      $region49: #{batchnorm_conv1d_stack.4} parent=47 // pred_check
        %p731 = pneg %p157
      $region50: #{batchnorm_conv1d_stack.4} parent=47 // pred_check_branch
        %733 = sbr.rel (%p731) target = $region52
      $region51: #{batchnorm_conv1d_stack.4} parent=47 // pred_region
        %s734 = smul.u32 2, %s24
        %p735 = scmp.lt.s32.totalorder %s23, 1
        %s736 = scalar_select %p735, %s23, 1
        %p737 = scmp.lt.s32.totalorder %s734, 1
        %s738 = scalar_select %p737, %s734, 1
        %s739 = smul.addr %s736, 2
        %s740 = sadd.s32 %s738, %s739
        %s741 = smul.addr %s740, 8
        %s742 = scalar_lea.vmem %s4, %s741
      $region52: #{batchnorm_conv1d_stack.4} parent=47 // pred_fallthru
        _
      // Predicated region
      $region53: #{batchnorm_conv1d_stack.4} parent=47 // pred_check
        %p743 = pneg %p185
      $region54: #{batchnorm_conv1d_stack.4} parent=47 // pred_check_branch
        %745 = sbr.rel (%p743) target = $region56
      $region55: #{batchnorm_conv1d_stack.4} parent=47 // pred_region
        %p746 = scmp.lt.s32.totalorder %s23, 1
        %s747 = scalar_select %p746, %s23, 1
        %p748 = scmp.lt.s32.totalorder %s24, 0
        %s749 = scalar_select %p748, %s24, 0
        %s750 = sadd.s32 %s749, %s747
        %s751 = smul.addr %s750, 2
        %s752 = scalar_lea.vmem %s5, %s751
      $region56: #{batchnorm_conv1d_stack.4} parent=47 // pred_fallthru
        _
    $region48: #{batchnorm_conv1d_stack.4} parent=5 // pred_fallthru
      _
  $region6: #{batchnorm_conv1d_stack.4} parent=0 // loop_footer
    %s16 = sadd.s32 1, %s12
  $region7: #{batchnorm_conv1d_stack.4} parent=0 // loop_footer_branch
    %11 = sbr.rel target = $region3
  $region8: #{batchnorm_conv1d_stack.4} parent=0 // loop_exit
    _

// kernel: batchnorm_conv1d_stack.6
$region0: #{batchnorm_conv1d_stack.6}
  #allocation0 [shape = 'u32[]', space=smem, size = 0x4, offset = 0x4, fixed_abs, tag = 'smem constant byte address 0x4 - core index']
  #allocation1 [shape = 'u32[144,128]{1,0:T(1,128)}', space=vmem, size = 0x12000, scoped, tag = 'internal scratch']
  #allocation2 [shape = 'f32[24,128]{1,0:T(8,128)}', space=vmem, size = 0x3000, scoped, tag = 'scratch operand']
  %s0 = inlined_call_operand.vmem [shape: f32[2,128], index: 0, kind: input, shape index: {}]
  %s1 = inlined_call_operand.vmem [shape: f32[2,24,128], index: 1, kind: input, shape index: {}, may-alias: {1,2}]
  %s2 = inlined_call_operand.vmem [shape: f32[2,24,128], index: 2, kind: input, shape index: {}, may-alias: {1,2}]
  %s3 = inlined_call_operand.vmem [shape: f32[3,128,128], index: 3, kind: input, shape index: {}]
  %s4 = inlined_call_operand.vmem [shape: f32[2,16,128], index: 4, kind: output, shape index: {0}]
  %s5 = inlined_call_operand.vmem [shape: f32[2,1,2,128], index: 5, kind: output, shape index: {1}]
  %6 = xla_tuple %s4, %s5
  %s7 = sld [smem:[#allocation0]]
  $region57: #{batchnorm_conv1d_stack.6} parent=0
    _
  %s9 = ssub.s32 1, %s7
  %s10 = scalar_select 0, %s9, %s7
  loop: start=0, step=1, limit=4
  $region2: #{batchnorm_conv1d_stack.6} parent=0 // loop_pre_header
    _
  $region3: #{batchnorm_conv1d_stack.6} parent=0 // loop_header
    %s12 = sphi 0, %s16
    %p13 = scmp.ge.s32.totalorder %s12, 4
    %s19 = sphi 0, %s31
    %s20 = sphi 0, %s27
    %s21 = sphi 0, %s19
    %s22 = sphi 0, %s20
    %s23 = sphi 0, %s21
    %s24 = sphi 0, %s22
    %s32 = sphi 0, %s32
    %s34 = sphi 0, %s32
    %s35 = sphi 0, %s34
    %s49 = sphi 0, %s35
    %s57 = sphi 0, %s59
    %s60 = sphi 0, %s57
    %s61 = sphi 0, %s60
    %s77 = sphi 0, %s61
    %s89 = sphi 0, %s91
    %s92 = sphi 0, %s89
    %s93 = sphi 0, %s92
    %s109 = sphi 0, %s93
    %s113 = sphi 0, %s113
    %s115 = sphi 0, %s113
    %s116 = sphi 0, %s115
    %s130 = sphi 0, %s116
    %s138 = sphi 0, %s140
    %s141 = sphi 0, %s138
    %s142 = sphi 0, %s141
    %s158 = sphi 0, %s142
    %s166 = sphi 0, %s168
    %s169 = sphi 0, %s166
    %s170 = sphi 0, %s169
    %s186 = sphi 0, %s170
  $region4: #{batchnorm_conv1d_stack.6} parent=0 // loop_header_branch
    %15 = sbr.rel (%p13) target = $region8
  $region5: #{batchnorm_conv1d_stack.6} parent=0 // loop_body
    %s17 = ssub.s32 %s12, 1
    %s18 = ssub.s32 %s12, 2
    %s25 = sadd.s32 1, %s20
    %p26 = scmp.ge.s32.totalorder %s25, 1
    %s27 = scalar_select %p26, 0, %s25
    %s28 = sadd.s32 1, %s19
    %s29 = scalar_select %p26, %s28, %s19
    %p30 = scmp.ge.s32.totalorder %s29, 2
    %s31 = scalar_select %p30, 0, %s29
    %s33 = sadd.s32 %s32, 1
    %p36 = scmp.eq.s32.totalorder %s12, 1
    %p37 = scmp.ne.s32.totalorder %s32, %s34
    %p38 = scmp.eq.s32.totalorder %s12, 0
    %p39 = por %p37, %p38
    %p40 = scmp.ne.s32.totalorder %s32, %s34
    %p41 = scmp.eq.s32.totalorder %s17, 1
    %p42 = por %p40, %p41
    %p43 = scmp.ne.s32.totalorder %s34, %s35
    %p44 = scmp.eq.s32.totalorder %s17, 0
    %p45 = por %p43, %p44
    %p46 = scmp.ne.s32.totalorder %s34, %s35
    %p47 = scmp.eq.s32.totalorder %s18, 1
    %p48 = por %p46, %p47
    %p50 = scmp.ne.s32.totalorder %s35, %s49
    %p51 = scmp.eq.s32.totalorder %s18, 0
    %p52 = por %p50, %p51
    %s53 = ssub.s32 %s19, %s31
    %s54 = ssub.s32 %s20, %s27
    %s55 = sor.u32 %s53, %s54
    %p56 = scmp.eq.s32.totalorder %s55, 0
    %s58 = sadd.s32 %s57, 1
    %s59 = scalar_select %p56, %s57, %s58
    %p62 = pneg %p56
    %p63 = scmp.eq.s32.totalorder %s12, 1
    %p64 = por %p62, %p63
    %p65 = scmp.ne.s32.totalorder %s57, %s60
    %p66 = scmp.eq.s32.totalorder %s12, 0
    %p67 = por %p65, %p66
    %p68 = scmp.ne.s32.totalorder %s57, %s60
    %p69 = scmp.eq.s32.totalorder %s17, 1
    %p70 = por %p68, %p69
    %p71 = scmp.ne.s32.totalorder %s60, %s61
    %p72 = scmp.eq.s32.totalorder %s17, 0
    %p73 = por %p71, %p72
    %p74 = scmp.ne.s32.totalorder %s60, %s61
    %p75 = scmp.eq.s32.totalorder %s18, 1
    %p76 = por %p74, %p75
    %p78 = scmp.ne.s32.totalorder %s61, %s77
    %p79 = scmp.eq.s32.totalorder %s18, 0
    %p80 = por %p78, %p79
    %s81 = sadd.s32 %s20, 1
    %s82 = smul.u32 %s81, 2
    %s83 = sadd.s32 %s27, 1
    %s84 = smul.u32 %s83, 2
    %s85 = ssub.s32 %s19, %s31
    %s86 = ssub.s32 %s82, %s84
    %s87 = sor.u32 %s85, %s86
    %p88 = scmp.eq.s32.totalorder %s87, 0
    %s90 = sadd.s32 %s89, 1
    %s91 = scalar_select %p88, %s89, %s90
    %p94 = pneg %p88
    %p95 = scmp.eq.s32.totalorder %s12, 1
    %p96 = por %p94, %p95
    %p97 = scmp.ne.s32.totalorder %s89, %s92
    %p98 = scmp.eq.s32.totalorder %s12, 0
    %p99 = por %p97, %p98
    %p100 = scmp.ne.s32.totalorder %s89, %s92
    %p101 = scmp.eq.s32.totalorder %s17, 1
    %p102 = por %p100, %p101
    %p103 = scmp.ne.s32.totalorder %s92, %s93
    %p104 = scmp.eq.s32.totalorder %s17, 0
    %p105 = por %p103, %p104
    %p106 = scmp.ne.s32.totalorder %s92, %s93
    %p107 = scmp.eq.s32.totalorder %s18, 1
    %p108 = por %p106, %p107
    %p110 = scmp.ne.s32.totalorder %s93, %s109
    %p111 = scmp.eq.s32.totalorder %s18, 0
    %p112 = por %p110, %p111
    %s114 = sadd.s32 %s113, 1
    %p117 = scmp.eq.s32.totalorder %s12, 1
    %p118 = scmp.ne.s32.totalorder %s113, %s115
    %p119 = scmp.eq.s32.totalorder %s12, 0
    %p120 = por %p118, %p119
    %p121 = scmp.ne.s32.totalorder %s113, %s115
    %p122 = scmp.eq.s32.totalorder %s17, 1
    %p123 = por %p121, %p122
    %p124 = scmp.ne.s32.totalorder %s115, %s116
    %p125 = scmp.eq.s32.totalorder %s17, 0
    %p126 = por %p124, %p125
    %p127 = scmp.ne.s32.totalorder %s115, %s116
    %p128 = scmp.eq.s32.totalorder %s18, 1
    %p129 = por %p127, %p128
    %p131 = scmp.ne.s32.totalorder %s116, %s130
    %p132 = scmp.eq.s32.totalorder %s18, 0
    %p133 = por %p131, %p132
    %s134 = ssub.s32 %s19, %s31
    %s135 = ssub.s32 %s20, %s27
    %s136 = sor.u32 %s134, %s135
    %p137 = scmp.eq.s32.totalorder %s136, 0
    %s139 = sadd.s32 %s138, 1
    %s140 = scalar_select %p137, %s138, %s139
    %p143 = pneg %p137
    %p144 = scmp.eq.s32.totalorder %s12, 1
    %p145 = por %p143, %p144
    %p146 = scmp.ne.s32.totalorder %s138, %s141
    %p147 = scmp.eq.s32.totalorder %s12, 0
    %p148 = por %p146, %p147
    %p149 = scmp.ne.s32.totalorder %s138, %s141
    %p150 = scmp.eq.s32.totalorder %s17, 1
    %p151 = por %p149, %p150
    %p152 = scmp.ne.s32.totalorder %s141, %s142
    %p153 = scmp.eq.s32.totalorder %s17, 0
    %p154 = por %p152, %p153
    %p155 = scmp.ne.s32.totalorder %s141, %s142
    %p156 = scmp.eq.s32.totalorder %s18, 1
    %p157 = por %p155, %p156
    %p159 = scmp.ne.s32.totalorder %s142, %s158
    %p160 = scmp.eq.s32.totalorder %s18, 0
    %p161 = por %p159, %p160
    %s162 = ssub.s32 %s19, %s31
    %s163 = ssub.s32 %s20, %s27
    %s164 = sor.u32 %s162, %s163
    %p165 = scmp.eq.s32.totalorder %s164, 0
    %s167 = sadd.s32 %s166, 1
    %s168 = scalar_select %p165, %s166, %s167
    %p171 = pneg %p165
    %p172 = scmp.eq.s32.totalorder %s12, 1
    %p173 = por %p171, %p172
    %p174 = scmp.ne.s32.totalorder %s166, %s169
    %p175 = scmp.eq.s32.totalorder %s12, 0
    %p176 = por %p174, %p175
    %p177 = scmp.ne.s32.totalorder %s166, %s169
    %p178 = scmp.eq.s32.totalorder %s17, 1
    %p179 = por %p177, %p178
    %p180 = scmp.ne.s32.totalorder %s169, %s170
    %p181 = scmp.eq.s32.totalorder %s17, 0
    %p182 = por %p180, %p181
    %p183 = scmp.ne.s32.totalorder %s169, %s170
    %p184 = scmp.eq.s32.totalorder %s18, 1
    %p185 = por %p183, %p184
    %p187 = scmp.ne.s32.totalorder %s170, %s186
    %p188 = scmp.eq.s32.totalorder %s18, 0
    %p189 = por %p187, %p188
    %p190 = scmp.le.s32.totalorder 1, %s12
    %p191 = scmp.lt.s32.totalorder %s12, 3
    %p192 = pnand %p190, %p191
    %p193 = pneg %p192
    // Predicated region
    $region9: #{batchnorm_conv1d_stack.6} parent=5 // pred_check
      _
    $region10: #{batchnorm_conv1d_stack.6} parent=5 // pred_check_branch
      %195 = sbr.rel (%p192) target = $region12
    $region11: #{batchnorm_conv1d_stack.6} parent=5 // pred_region
      %s196 = ssub.s32 %s12, 1
      // Predicated region
      $region13: #{batchnorm_conv1d_stack.6} parent=11 // pred_check
        %p197 = pneg %p45
      $region14: #{batchnorm_conv1d_stack.6} parent=11 // pred_check_branch
        %199 = sbr.rel (%p197) target = $region16
      $region15: #{batchnorm_conv1d_stack.6} parent=11 // pred_region
        _
      $region16: #{batchnorm_conv1d_stack.6} parent=11 // pred_fallthru
        _
      // Predicated region
      $region17: #{batchnorm_conv1d_stack.6} parent=11 // pred_check
        %p200 = pneg %p126
      $region18: #{batchnorm_conv1d_stack.6} parent=11 // pred_check_branch
        %202 = sbr.rel (%p200) target = $region20
      $region19: #{batchnorm_conv1d_stack.6} parent=11 // pred_region
        _
      $region20: #{batchnorm_conv1d_stack.6} parent=11 // pred_fallthru
        _
    $region12: #{batchnorm_conv1d_stack.6} parent=5 // pred_fallthru
      _
    %p203 = scmp.lt.s32.totalorder %s12, 2
    // Predicated region
    $region21: #{batchnorm_conv1d_stack.6} parent=5 // pred_check
      %p204 = pneg %p203
    $region22: #{batchnorm_conv1d_stack.6} parent=5 // pred_check_branch
      %206 = sbr.rel (%p204) target = $region24
    $region23: #{batchnorm_conv1d_stack.6} parent=5 // pred_region
      // Predicated region
      $region25: #{batchnorm_conv1d_stack.6} parent=23 // pred_check
        %p207 = pneg %p67
      $region26: #{batchnorm_conv1d_stack.6} parent=23 // pred_check_branch
        %209 = sbr.rel (%p207) target = $region28
      $region27: #{batchnorm_conv1d_stack.6} parent=23 // pred_region
        %s210 = smul.u32 2, %s20
        %s211 = ssub.s32 3, %s210
        %p212 = scmp.lt.s32.totalorder %s211, 2
        %s213 = scalar_select %p212, %s211, 2
        %s214 = smul.u32 128, %s213
        %p215 = scmp.lt.s32.totalorder %s19, 1
        %s216 = scalar_select %p215, %s19, 1
        %p217 = scmp.lt.s32.totalorder %s210, 2
        %s218 = scalar_select %p217, %s210, 2
        %s219 = smul.addr %s216, 3
        %s220 = sadd.s32 %s218, %s219
        %s221 = smul.addr %s220, 8
        %s222 = scalar_lea.vmem %s1, %s221
        %s223 = smul.u32 2, %s20
        %s224 = ssub.s32 3, %s223
        %p225 = scmp.lt.s32.totalorder %s224, 2
        %s226 = scalar_select %p225, %s224, 2
        %s227 = smul.u32 128, %s226
      $region28: #{batchnorm_conv1d_stack.6} parent=23 // pred_fallthru
        _
      // Predicated region
      $region29: #{batchnorm_conv1d_stack.6} parent=23 // pred_check
        %p228 = pneg %p99
      $region30: #{batchnorm_conv1d_stack.6} parent=23 // pred_check_branch
        %230 = sbr.rel (%p228) target = $region32
      $region31: #{batchnorm_conv1d_stack.6} parent=23 // pred_region
        %s231 = sadd.s32 %s20, 1
        %s232 = smul.u32 %s231, 2
        %p233 = scmp.lt.s32.totalorder %s19, 1
        %s234 = scalar_select %p233, %s19, 1
        %p235 = scmp.lt.s32.totalorder %s232, 2
        %s236 = scalar_select %p235, %s232, 2
        %s237 = smul.addr %s234, 3
        %s238 = sadd.s32 %s236, %s237
        %s239 = smul.addr %s238, 8
        %s240 = scalar_lea.vmem %s2, %s239
        %s241 = sadd.s32 %s20, 1
        %s242 = smul.u32 %s241, 2
      $region32: #{batchnorm_conv1d_stack.6} parent=23 // pred_fallthru
        _
    $region24: #{batchnorm_conv1d_stack.6} parent=5 // pred_fallthru
      _
    %p243 = scmp.le.s32.totalorder 1, %s12
    %p244 = scmp.lt.s32.totalorder %s12, 3
    %p245 = pnand %p243, %p244
    %p246 = pneg %p245
    // Predicated region
    $region33: #{batchnorm_conv1d_stack.6} parent=5 // pred_check
      _
    $region34: #{batchnorm_conv1d_stack.6} parent=5 // pred_check_branch
      %248 = sbr.rel (%p245) target = $region36
    $region35: #{batchnorm_conv1d_stack.6} parent=5 // pred_region
      %s249 = ssub.s32 %s12, 1
      %p250 = pneg %p45
      %p251 = pneg %p42
      %s252 = smul.u32 2, %s22
      %s253 = ssub.s32 3, %s252
      %p254 = scmp.lt.s32.totalorder %s253, 2
      %s255 = scalar_select %p254, %s253, 2
      %s256 = smul.u32 128, %s255
      %p257 = scmp.lt.s32.totalorder %s21, 1
      %s258 = scalar_select %p257, %s21, 1
      %p259 = scmp.lt.s32.totalorder %s252, 2
      %s260 = scalar_select %p259, %s252, 2
      %s261 = smul.addr %s258, 3
      %s262 = sadd.s32 %s260, %s261
      %s263 = smul.addr %s262, 8
      %s264 = scalar_lea.vmem %s1, %s263
      %p265 = pneg %p73
      %p266 = pneg %p70
      %s267 = sadd.s32 %s22, 1
      %s268 = smul.u32 %s267, 2
      %p269 = scmp.lt.s32.totalorder %s21, 1
      %s270 = scalar_select %p269, %s21, 1
      %p271 = scmp.lt.s32.totalorder %s268, 2
      %s272 = scalar_select %p271, %s268, 2
      %s273 = smul.addr %s270, 3
      %s274 = sadd.s32 %s272, %s273
      %s275 = smul.addr %s274, 8
      %s276 = scalar_lea.vmem %s2, %s275
      %p277 = pneg %p105
      %p278 = pneg %p102
      %p279 = pneg %p126
      %p280 = pneg %p123
      %p281 = pneg %p154
      %p282 = pneg %p151
      %s283 = smul.u32 2, %s22
      %p284 = scmp.lt.s32.totalorder %s21, 1
      %s285 = scalar_select %p284, %s21, 1
      %p286 = scmp.lt.s32.totalorder %s283, 1
      %s287 = scalar_select %p286, %s283, 1
      %s288 = smul.addr %s285, 2
      %s289 = sadd.s32 %s287, %s288
      %s290 = smul.addr %s289, 8
      %s291 = scalar_lea.vmem %s4, %s290
      %p292 = pneg %p182
      %p293 = pneg %p179
      %p294 = scmp.lt.s32.totalorder %s21, 1
      %s295 = scalar_select %p294, %s21, 1
      %p296 = scmp.lt.s32.totalorder %s22, 0
      %s297 = scalar_select %p296, %s22, 0
      %s298 = sadd.s32 %s297, %s295
      %s299 = smul.addr %s298, 2
      %s300 = scalar_lea.vmem %s5, %s299
      %s301 = smul.u32 2, %s22
      %s302 = ssub.s32 3, %s301
      %p303 = scmp.lt.s32.totalorder %s302, 2
      %s304 = scalar_select %p303, %s302, 2
      %s305 = smul.u32 128, %s304
      %p306 = scmp.lt.s32.totalorder %s21, 1
      %s307 = scalar_select %p306, %s21, 1
      %p308 = scmp.lt.s32.totalorder %s301, 2
      %s309 = scalar_select %p308, %s301, 2
      %s310 = smul.addr %s307, 3
      %s311 = sadd.s32 %s309, %s310
      %s312 = smul.addr %s311, 8
      %s313 = scalar_lea.vmem %s1, %s312
      %s314 = smul.u32 2, %s22
      %s315 = ssub.s32 3, %s314
      %p316 = scmp.lt.s32.totalorder %s315, 2
      %s317 = scalar_select %p316, %s315, 2
      %s318 = smul.u32 128, %s317
      %s319 = sadd.s32 %s22, 1
      %s320 = smul.u32 %s319, 2
      %p321 = scmp.lt.s32.totalorder %s21, 1
      %s322 = scalar_select %p321, %s21, 1
      %p323 = scmp.lt.s32.totalorder %s320, 2
      %s324 = scalar_select %p323, %s320, 2
      %s325 = smul.addr %s322, 3
      %s326 = sadd.s32 %s324, %s325
      %s327 = smul.addr %s326, 8
      %s328 = scalar_lea.vmem %s2, %s327
      %s329 = sadd.s32 %s22, 1
      %s330 = smul.u32 %s329, 2
      %s331 = smul.u32 2, %s22
      %p332 = scmp.lt.s32.totalorder %s21, 1
      %s333 = scalar_select %p332, %s21, 1
      %p334 = scmp.lt.s32.totalorder %s331, 1
      %s335 = scalar_select %p334, %s331, 1
      %s336 = smul.addr %s333, 2
      %s337 = sadd.s32 %s335, %s336
      %s338 = smul.addr %s337, 8
      %s339 = scalar_lea.vmem %s4, %s338
      %s340 = smul.u32 2, %s22
      %p341 = scmp.lt.s32.totalorder %s21, 1
      %s342 = scalar_select %p341, %s21, 1
      %p343 = scmp.lt.s32.totalorder %s22, 0
      %s344 = scalar_select %p343, %s22, 0
      %s345 = sadd.s32 %s344, %s342
      %s346 = smul.addr %s345, 2
      %s347 = scalar_lea.vmem %s5, %s346
      %s348 = smul.u32 %s22, 16
      %v349 = vld [vmem:[%s0] sm:$0x1]
      %v350 = vld [vmem:[%s0 + $0x1] sm:$0x1]
      %v351 = vld [vmem:[%s313] sm:$0xff]
      %v352 = vld [vmem:[%s313 + $0x8] sm:$0xff]
      %v353 = vlaneseq
      %v354 = vshrl.u32 %v353, 7
      %v355 = vadd.s32 %v354, 8
      %v356 = vstv %s348
      %v357 = vadd.s32 %v354, %v356
      %v358 = vadd.s32 %v355, %v356
      %vm359 = vcmp.ge.s32.totalorder %v357, 1
      %vm360 = vcmp.ge.s32.totalorder %v358, 1
      %vm361 = vcmp.lt.s32.totalorder %v357, 17
      %vm362 = vcmp.lt.s32.totalorder %v358, 17
      %vm363 = vmand %vm359, %vm361
      %vm364 = vmand %vm360, %vm362
      %v365 = vlaneseq
      %v366 = vshrl.u32 %v365, 7
      %v367 = vsub.s32 0, %v366
      %v368 = vrot.slane %v349, %v367
      %v369 = vmul.f32 %v351, %v368
      %v370 = vmul.f32 %v352, %v368
      %v371 = vlaneseq
      %v372 = vshrl.u32 %v371, 7
      %v373 = vsub.s32 0, %v372
      %v374 = vrot.slane %v350, %v373
      %v375 = vadd.f32 %v369, %v374
      %v376 = vadd.f32 %v370, %v374
      %v377 = vsel %vm363, 1, 0
      %v378 = vsel %vm364, 1, 0
      %vm379 = vcmp.eq.s32.totalorder %v377, 1
      %vm380 = vcmp.eq.s32.totalorder %v378, 1
      %v381 = vsel %vm379, %v375, 0.0
      %v382 = vsel %vm380, %v376, 0.0
      %383 = vst [vmem:[#allocation2] sm:$0xff] %v381
      %384 = vst [vmem:[#allocation2 + $0x8] sm:$0xff] %v382
      %v385 = vld [vmem:[%s328] sm:$0xff]
      %s386 = sadd.s32 %s348, 16
      %v387 = vstv %s386
      %v388 = vadd.s32 %v354, %v387
      %vm389 = vcmp.ge.s32.totalorder %v388, 1
      %vm390 = vcmp.lt.s32.totalorder %v388, 17
      %vm391 = vmand %vm389, %vm390
      %v392 = vmul.f32 %v385, %v368
      %v393 = vadd.f32 %v392, %v374
      %v394 = vsel %vm391, 1, 0
      %vm395 = vcmp.eq.s32.totalorder %v394, 1
      %v396 = vsel %vm395, %v393, 0.0
      %397 = vst [vmem:[#allocation2 + $0x10] sm:$0xff] %v396
      %v398 = vld [vmem:[#allocation2] sm:$0xff]
      %v399 = vld [vmem:[#allocation2 + $0x8] sm:$0xff]
      %v400 = vld [vmem:[%s3] sm:$0xff]
      %v401 = vld [vmem:[%s3 + $0x8] sm:$0xff]
      %v402 = vld [vmem:[%s3 + $0x10] sm:$0xff]
      %v403 = vld [vmem:[%s3 + $0x18] sm:$0xff]
      %v404 = vld [vmem:[%s3 + $0x20] sm:$0xff]
      %v405 = vld [vmem:[%s3 + $0x28] sm:$0xff]
      %v406 = vld [vmem:[%s3 + $0x30] sm:$0xff]
      %v407 = vld [vmem:[%s3 + $0x38] sm:$0xff]
      %v408 = vld [vmem:[%s3 + $0x40] sm:$0xff]
      %v409 = vld [vmem:[%s3 + $0x48] sm:$0xff]
      %v410 = vld [vmem:[%s3 + $0x50] sm:$0xff]
      %v411 = vld [vmem:[%s3 + $0x58] sm:$0xff]
      %v412 = vld [vmem:[%s3 + $0x60] sm:$0xff]
      %v413 = vld [vmem:[%s3 + $0x68] sm:$0xff]
      %v414 = vld [vmem:[%s3 + $0x70] sm:$0xff]
      %v415 = vld [vmem:[%s3 + $0x78] sm:$0xff]
      %v416 = vld [vmem:[#allocation2 + $0x1] sm:$0xff]
      %v417 = vld [vmem:[#allocation2 + $0x9] sm:$0xff]
      %s418 = scalar_lea.vmem %s3, 128
      %v419 = vld [vmem:[%s418] sm:$0xff]
      %v420 = vld [vmem:[%s418 + $0x8] sm:$0xff]
      %v421 = vld [vmem:[%s418 + $0x10] sm:$0xff]
      %v422 = vld [vmem:[%s418 + $0x18] sm:$0xff]
      %v423 = vld [vmem:[%s418 + $0x20] sm:$0xff]
      %v424 = vld [vmem:[%s418 + $0x28] sm:$0xff]
      %v425 = vld [vmem:[%s418 + $0x30] sm:$0xff]
      %v426 = vld [vmem:[%s418 + $0x38] sm:$0xff]
      %v427 = vld [vmem:[%s418 + $0x40] sm:$0xff]
      %v428 = vld [vmem:[%s418 + $0x48] sm:$0xff]
      %v429 = vld [vmem:[%s418 + $0x50] sm:$0xff]
      %v430 = vld [vmem:[%s418 + $0x58] sm:$0xff]
      %v431 = vld [vmem:[%s418 + $0x60] sm:$0xff]
      %v432 = vld [vmem:[%s418 + $0x68] sm:$0xff]
      %v433 = vld [vmem:[%s418 + $0x70] sm:$0xff]
      %v434 = vld [vmem:[%s418 + $0x78] sm:$0xff]
      %435 = vmatprep.subr.mxu0 0.0
      %436 = vmatpush1.msra.mxu0 %v419
      %437 = vmatprep.subr.mxu0 0.0
      %438 = vmatpush1.msra.mxu0 %v420
      %439 = vmatprep.subr.mxu0 0.0
      %440 = vmatpush1.msra.mxu0 %v421
      %441 = vmatprep.subr.mxu0 0.0
      %442 = vmatpush1.msra.mxu0 %v422
      %443 = vmatprep.subr.mxu0 0.0
      %444 = vmatpush1.msra.mxu0 %v423
      %445 = vmatprep.subr.mxu0 0.0
      %446 = vmatpush1.msra.mxu0 %v424
      %447 = vmatprep.subr.mxu0 0.0
      %448 = vmatpush1.msra.mxu0 %v425
      %449 = vmatprep.subr.mxu0 0.0
      %450 = vmatpush1.msra.mxu0 %v426
      %451 = vmatprep.subr.mxu0 0.0
      %452 = vmatpush1.msra.mxu0 %v427
      %453 = vmatprep.subr.mxu0 0.0
      %454 = vmatpush1.msra.mxu0 %v428
      %455 = vmatprep.subr.mxu0 0.0
      %456 = vmatpush1.msra.mxu0 %v429
      %457 = vmatprep.subr.mxu0 0.0
      %458 = vmatpush1.msra.mxu0 %v430
      %459 = vmatprep.subr.mxu0 0.0
      %460 = vmatpush1.msra.mxu0 %v431
      %461 = vmatprep.subr.mxu0 0.0
      %462 = vmatpush1.msra.mxu0 %v432
      %463 = vmatprep.subr.mxu0 0.0
      %464 = vmatpush1.msra.mxu0 %v433
      %465 = vmatprep.subr.mxu0 0.0
      %466 = vmatpush1.msra.mxu0 %v434
      %467 = vmatprep.subr.mxu0 0.0
      %468 = vmatpush1.msra.mxu0 0.0
      %469 = vmatprep.subr.mxu0 0.0
      %470 = vmatpush1.msra.mxu0 0.0
      %471 = vmatprep.subr.mxu0 0.0
      %472 = vmatpush1.msra.mxu0 0.0
      %473 = vmatprep.subr.mxu0 0.0
      %474 = vmatpush1.msra.mxu0 0.0
      %475 = vmatprep.subr.mxu0 0.0
      %476 = vmatpush1.msra.mxu0 0.0
      %477 = vmatprep.subr.mxu0 0.0
      %478 = vmatpush1.msra.mxu0 0.0
      %479 = vmatprep.subr.mxu0 0.0
      %480 = vmatpush1.msra.mxu0 0.0
      %481 = vmatprep.subr.mxu0 0.0
      %482 = vmatpush1.msra.mxu0 0.0
      %483 = vmatprep.subr.mxu0 0.0
      %484 = vmatpush1.msra.mxu0 0.0
      %485 = vmatprep.subr.mxu0 0.0
      %486 = vmatpush1.msra.mxu0 0.0
      %487 = vmatprep.subr.mxu0 0.0
      %488 = vmatpush1.msra.mxu0 0.0
      %489 = vmatprep.subr.mxu0 0.0
      %490 = vmatpush1.msra.mxu0 0.0
      %491 = vmatprep.subr.mxu0 0.0
      %492 = vmatpush1.msra.mxu0 0.0
      %493 = vmatprep.subr.mxu0 0.0
      %494 = vmatpush1.msra.mxu0 0.0
      %495 = vmatprep.subr.mxu0 0.0
      %496 = vmatpush1.msra.mxu0 0.0
      %497 = vmatprep.subr.mxu0 0.0
      %498 = vmatpush1.msra.mxu0 0.0
      %499 = vmatprep.mubr.f32.mxu0 0.0
      %500 = vmatmul.mubr.f32.gmra.mrb[0].mxu0 %v416
      %v501 = vpop.f32.mrb[0].mxu0
      %v502 = vadd.f32 0.0, %v501
      %v503 = vpop.f32.mrb[0].mxu0
      %504 = vmatprep.mubr.f32.mxu0 0.0
      %505 = vmatmul.mubr.f32.gmra.mrb[0].mxu0 %v417
      %v506 = vpop.f32.mrb[0].mxu0
      %v507 = vadd.f32 0.0, %v506
      %v508 = vpop.f32.mrb[0].mxu0
      %509 = vdwg.mxu0
      %510 = vmatprep.subr.mxu0 0.0
      %511 = vmatpush1.msra.mxu0 %v400
      %512 = vmatprep.subr.mxu0 0.0
      %513 = vmatpush1.msra.mxu0 %v401
      %514 = vmatprep.subr.mxu0 0.0
      %515 = vmatpush1.msra.mxu0 %v402
      %516 = vmatprep.subr.mxu0 0.0
      %517 = vmatpush1.msra.mxu0 %v403
      %518 = vmatprep.subr.mxu0 0.0
      %519 = vmatpush1.msra.mxu0 %v404
      %520 = vmatprep.subr.mxu0 0.0
      %521 = vmatpush1.msra.mxu0 %v405
      %522 = vmatprep.subr.mxu0 0.0
      %523 = vmatpush1.msra.mxu0 %v406
      %524 = vmatprep.subr.mxu0 0.0
      %525 = vmatpush1.msra.mxu0 %v407
      %526 = vmatprep.subr.mxu0 0.0
      %527 = vmatpush1.msra.mxu0 %v408
      %528 = vmatprep.subr.mxu0 0.0
      %529 = vmatpush1.msra.mxu0 %v409
      %530 = vmatprep.subr.mxu0 0.0
      %531 = vmatpush1.msra.mxu0 %v410
      %532 = vmatprep.subr.mxu0 0.0
      %533 = vmatpush1.msra.mxu0 %v411
      %534 = vmatprep.subr.mxu0 0.0
      %535 = vmatpush1.msra.mxu0 %v412
      %536 = vmatprep.subr.mxu0 0.0
      %537 = vmatpush1.msra.mxu0 %v413
      %538 = vmatprep.subr.mxu0 0.0
      %539 = vmatpush1.msra.mxu0 %v414
      %540 = vmatprep.subr.mxu0 0.0
      %541 = vmatpush1.msra.mxu0 %v415
      %542 = vmatprep.subr.mxu0 0.0
      %543 = vmatpush1.msra.mxu0 0.0
      %544 = vmatprep.subr.mxu0 0.0
      %545 = vmatpush1.msra.mxu0 0.0
      %546 = vmatprep.subr.mxu0 0.0
      %547 = vmatpush1.msra.mxu0 0.0
      %548 = vmatprep.subr.mxu0 0.0
      %549 = vmatpush1.msra.mxu0 0.0
      %550 = vmatprep.subr.mxu0 0.0
      %551 = vmatpush1.msra.mxu0 0.0
      %552 = vmatprep.subr.mxu0 0.0
      %553 = vmatpush1.msra.mxu0 0.0
      %554 = vmatprep.subr.mxu0 0.0
      %555 = vmatpush1.msra.mxu0 0.0
      %556 = vmatprep.subr.mxu0 0.0
      %557 = vmatpush1.msra.mxu0 0.0
      %558 = vmatprep.subr.mxu0 0.0
      %559 = vmatpush1.msra.mxu0 0.0
      %560 = vmatprep.subr.mxu0 0.0
      %561 = vmatpush1.msra.mxu0 0.0
      %562 = vmatprep.subr.mxu0 0.0
      %563 = vmatpush1.msra.mxu0 0.0
      %564 = vmatprep.subr.mxu0 0.0
      %565 = vmatpush1.msra.mxu0 0.0
      %566 = vmatprep.subr.mxu0 0.0
      %567 = vmatpush1.msra.mxu0 0.0
      %568 = vmatprep.subr.mxu0 0.0
      %569 = vmatpush1.msra.mxu0 0.0
      %570 = vmatprep.subr.mxu0 0.0
      %571 = vmatpush1.msra.mxu0 0.0
      %572 = vmatprep.subr.mxu0 0.0
      %573 = vmatpush1.msra.mxu0 0.0
      %574 = vmatprep.mubr.f32.mxu0 0.0
      %575 = vmatmul.mubr.f32.gmra.mrb[0].mxu0 %v398
      %v576 = vpop.f32.mrb[0].mxu0
      %v577 = vadd.f32 %v502, %v576
      %v578 = vpop.f32.mrb[0].mxu0
      %579 = vmatprep.mubr.f32.mxu0 0.0
      %580 = vmatmul.mubr.f32.gmra.mrb[0].mxu0 %v399
      %v581 = vpop.f32.mrb[0].mxu0
      %v582 = vadd.f32 %v507, %v581
      %v583 = vpop.f32.mrb[0].mxu0
      %584 = vdwg.mxu0
      %v585 = vld [vmem:[#allocation2 + $0x2] sm:$0xff]
      %v586 = vld [vmem:[#allocation2 + $0xa] sm:$0xff]
      %s587 = scalar_lea.vmem %s3, 256
      %v588 = vld [vmem:[%s587] sm:$0xff]
      %v589 = vld [vmem:[%s587 + $0x8] sm:$0xff]
      %v590 = vld [vmem:[%s587 + $0x10] sm:$0xff]
      %v591 = vld [vmem:[%s587 + $0x18] sm:$0xff]
      %v592 = vld [vmem:[%s587 + $0x20] sm:$0xff]
      %v593 = vld [vmem:[%s587 + $0x28] sm:$0xff]
      %v594 = vld [vmem:[%s587 + $0x30] sm:$0xff]
      %v595 = vld [vmem:[%s587 + $0x38] sm:$0xff]
      %v596 = vld [vmem:[%s587 + $0x40] sm:$0xff]
      %v597 = vld [vmem:[%s587 + $0x48] sm:$0xff]
      %v598 = vld [vmem:[%s587 + $0x50] sm:$0xff]
      %v599 = vld [vmem:[%s587 + $0x58] sm:$0xff]
      %v600 = vld [vmem:[%s587 + $0x60] sm:$0xff]
      %v601 = vld [vmem:[%s587 + $0x68] sm:$0xff]
      %v602 = vld [vmem:[%s587 + $0x70] sm:$0xff]
      %v603 = vld [vmem:[%s587 + $0x78] sm:$0xff]
      %604 = vmatprep.subr.mxu0 0.0
      %605 = vmatpush1.msra.mxu0 %v588
      %606 = vmatprep.subr.mxu0 0.0
      %607 = vmatpush1.msra.mxu0 %v589
      %608 = vmatprep.subr.mxu0 0.0
      %609 = vmatpush1.msra.mxu0 %v590
      %610 = vmatprep.subr.mxu0 0.0
      %611 = vmatpush1.msra.mxu0 %v591
      %612 = vmatprep.subr.mxu0 0.0
      %613 = vmatpush1.msra.mxu0 %v592
      %614 = vmatprep.subr.mxu0 0.0
      %615 = vmatpush1.msra.mxu0 %v593
      %616 = vmatprep.subr.mxu0 0.0
      %617 = vmatpush1.msra.mxu0 %v594
      %618 = vmatprep.subr.mxu0 0.0
      %619 = vmatpush1.msra.mxu0 %v595
      %620 = vmatprep.subr.mxu0 0.0
      %621 = vmatpush1.msra.mxu0 %v596
      %622 = vmatprep.subr.mxu0 0.0
      %623 = vmatpush1.msra.mxu0 %v597
      %624 = vmatprep.subr.mxu0 0.0
      %625 = vmatpush1.msra.mxu0 %v598
      %626 = vmatprep.subr.mxu0 0.0
      %627 = vmatpush1.msra.mxu0 %v599
      %628 = vmatprep.subr.mxu0 0.0
      %629 = vmatpush1.msra.mxu0 %v600
      %630 = vmatprep.subr.mxu0 0.0
      %631 = vmatpush1.msra.mxu0 %v601
      %632 = vmatprep.subr.mxu0 0.0
      %633 = vmatpush1.msra.mxu0 %v602
      %634 = vmatprep.subr.mxu0 0.0
      %635 = vmatpush1.msra.mxu0 %v603
      %636 = vmatprep.subr.mxu0 0.0
      %637 = vmatpush1.msra.mxu0 0.0
      %638 = vmatprep.subr.mxu0 0.0
      %639 = vmatpush1.msra.mxu0 0.0
      %640 = vmatprep.subr.mxu0 0.0
      %641 = vmatpush1.msra.mxu0 0.0
      %642 = vmatprep.subr.mxu0 0.0
      %643 = vmatpush1.msra.mxu0 0.0
      %644 = vmatprep.subr.mxu0 0.0
      %645 = vmatpush1.msra.mxu0 0.0
      %646 = vmatprep.subr.mxu0 0.0
      %647 = vmatpush1.msra.mxu0 0.0
      %648 = vmatprep.subr.mxu0 0.0
      %649 = vmatpush1.msra.mxu0 0.0
      %650 = vmatprep.subr.mxu0 0.0
      %651 = vmatpush1.msra.mxu0 0.0
      %652 = vmatprep.subr.mxu0 0.0
      %653 = vmatpush1.msra.mxu0 0.0
      %654 = vmatprep.subr.mxu0 0.0
      %655 = vmatpush1.msra.mxu0 0.0
      %656 = vmatprep.subr.mxu0 0.0
      %657 = vmatpush1.msra.mxu0 0.0
      %658 = vmatprep.subr.mxu0 0.0
      %659 = vmatpush1.msra.mxu0 0.0
      %660 = vmatprep.subr.mxu0 0.0
      %661 = vmatpush1.msra.mxu0 0.0
      %662 = vmatprep.subr.mxu0 0.0
      %663 = vmatpush1.msra.mxu0 0.0
      %664 = vmatprep.subr.mxu0 0.0
      %665 = vmatpush1.msra.mxu0 0.0
      %666 = vmatprep.subr.mxu0 0.0
      %667 = vmatpush1.msra.mxu0 0.0
      %668 = vmatprep.mubr.f32.mxu0 0.0
      %669 = vmatmul.mubr.f32.gmra.mrb[0].mxu0 %v585
      %v670 = vpop.f32.mrb[0].mxu0
      %v671 = vadd.f32 0.0, %v670
      %v672 = vpop.f32.mrb[0].mxu0
      %673 = vmatprep.mubr.f32.mxu0 0.0
      %674 = vmatmul.mubr.f32.gmra.mrb[0].mxu0 %v586
      %v675 = vpop.f32.mrb[0].mxu0
      %v676 = vadd.f32 0.0, %v675
      %v677 = vpop.f32.mrb[0].mxu0
      %678 = vdwg.mxu0
      %v679 = vadd.f32 %v577, %v671
      %v680 = vadd.f32 %v582, %v676
      %681 = vst [vmem:[%s339] sm:$0xff] %v679
      %682 = vst [vmem:[%s339 + $0x8] sm:$0xff] %v680
      %v683 = vadd.f32 %v679, %v680
      %v684 = vrot.slane %v683, 4
      %v685 = vadd.f32 %v683, %v684
      %v686 = vrot.slane %v685, 2
      %v687 = vadd.f32 %v685, %v686
      %v688 = vrot.slane %v687, 1
      %v689 = vadd.f32 %v687, %v688
      %690 = vst [vmem:[%s347] sm:$0x1] %v689
      %v691 = vmul.f32 %v679, %v679
      %v692 = vmul.f32 %v680, %v680
      %v693 = vadd.f32 %v691, %v692
      %v694 = vrot.slane %v693, 4
      %v695 = vadd.f32 %v693, %v694
      %v696 = vrot.slane %v695, 2
      %v697 = vadd.f32 %v695, %v696
      %v698 = vrot.slane %v697, 1
      %v699 = vadd.f32 %v697, %v698
      %700 = vst [vmem:[%s347 + $0x1] sm:$0x1] %v699
      %s701 = smul.u32 2, %s22
      %p702 = scmp.lt.s32.totalorder %s21, 1
      %s703 = scalar_select %p702, %s21, 1
      %p704 = scmp.lt.s32.totalorder %s701, 1
      %s705 = scalar_select %p704, %s701, 1
      %s706 = smul.addr %s703, 2
      %s707 = sadd.s32 %s705, %s706
      %s708 = smul.addr %s707, 8
      %s709 = scalar_lea.vmem %s4, %s708
      %p710 = scmp.lt.s32.totalorder %s21, 1
      %s711 = scalar_select %p710, %s21, 1
      %p712 = scmp.lt.s32.totalorder %s22, 0
      %s713 = scalar_select %p712, %s22, 0
      %s714 = sadd.s32 %s713, %s711
      %s715 = smul.addr %s714, 2
      %s716 = scalar_lea.vmem %s5, %s715
      // Predicated region
      $region37: #{batchnorm_conv1d_stack.6} parent=35 // pred_check
        %p717 = pneg %p151
      $region38: #{batchnorm_conv1d_stack.6} parent=35 // pred_check_branch
        %719 = sbr.rel (%p717) target = $region40
      $region39: #{batchnorm_conv1d_stack.6} parent=35 // pred_region
        %s720 = smul.u32 2, %s22
      $region40: #{batchnorm_conv1d_stack.6} parent=35 // pred_fallthru
        _
      // Predicated region
      $region41: #{batchnorm_conv1d_stack.6} parent=35 // pred_check
        %p721 = pneg %p179
      $region42: #{batchnorm_conv1d_stack.6} parent=35 // pred_check_branch
        %723 = sbr.rel (%p721) target = $region44
      $region43: #{batchnorm_conv1d_stack.6} parent=35 // pred_region
        _
      $region44: #{batchnorm_conv1d_stack.6} parent=35 // pred_fallthru
        _
    $region36: #{batchnorm_conv1d_stack.6} parent=5 // pred_fallthru
      _
    %p724 = scmp.le.s32.totalorder 2, %s12
    // Predicated region
    $region45: #{batchnorm_conv1d_stack.6} parent=5 // pred_check
      %p725 = pneg %p724
    $region46: #{batchnorm_conv1d_stack.6} parent=5 // pred_check_branch
      %727 = sbr.rel (%p725) target = $region48
    $region47: #{batchnorm_conv1d_stack.6} parent=5 // pred_region
      %s728 = ssub.s32 %s12, 2
      // Predicated region
      $region49: #{batchnorm_conv1d_stack.6} parent=47 // pred_check
        %p729 = pneg %p157
      $region50: #{batchnorm_conv1d_stack.6} parent=47 // pred_check_branch
        %731 = sbr.rel (%p729) target = $region52
      $region51: #{batchnorm_conv1d_stack.6} parent=47 // pred_region
        %s732 = smul.u32 2, %s24
        %p733 = scmp.lt.s32.totalorder %s23, 1
        %s734 = scalar_select %p733, %s23, 1
        %p735 = scmp.lt.s32.totalorder %s732, 1
        %s736 = scalar_select %p735, %s732, 1
        %s737 = smul.addr %s734, 2
        %s738 = sadd.s32 %s736, %s737
        %s739 = smul.addr %s738, 8
        %s740 = scalar_lea.vmem %s4, %s739
      $region52: #{batchnorm_conv1d_stack.6} parent=47 // pred_fallthru
        _
      // Predicated region
      $region53: #{batchnorm_conv1d_stack.6} parent=47 // pred_check
        %p741 = pneg %p185
      $region54: #{batchnorm_conv1d_stack.6} parent=47 // pred_check_branch
        %743 = sbr.rel (%p741) target = $region56
      $region55: #{batchnorm_conv1d_stack.6} parent=47 // pred_region
        %p744 = scmp.lt.s32.totalorder %s23, 1
        %s745 = scalar_select %p744, %s23, 1
        %p746 = scmp.lt.s32.totalorder %s24, 0
        %s747 = scalar_select %p746, %s24, 0
        %s748 = sadd.s32 %s747, %s745
        %s749 = smul.addr %s748, 2
        %s750 = scalar_lea.vmem %s5, %s749
      $region56: #{batchnorm_conv1d_stack.6} parent=47 // pred_fallthru
        _
    $region48: #{batchnorm_conv1d_stack.6} parent=5 // pred_fallthru
      _
  $region6: #{batchnorm_conv1d_stack.6} parent=0 // loop_footer
    %s16 = sadd.s32 1, %s12
  $region7: #{batchnorm_conv1d_stack.6} parent=0 // loop_footer_branch
    %11 = sbr.rel target = $region3
  $region8: #{batchnorm_conv1d_stack.6} parent=0 // loop_exit
    _

</llo_original>
